<compile_context>
chip_gen: v5e
topology: v5e:2x2
jax: 0.10.0
libtpu: 0.0.40
codegen_flags: <defaults>
</compile_context>

<pallas_src>
import functools

import jax
import jax.numpy as jnp
from jax.experimental import pallas as pl
from jax.experimental.pallas import tpu as pltpu

NEG_SLOPE = 0.01  # default negative_slope of F.leaky_relu
LANE = 128


def _leaky_relu(v):
    return jnp.where(v >= 0, v, NEG_SLOPE * v)


def _round_up(x, m):
    return (x + m - 1) // m * m


def mlp_kernel(x_ref, w1_ref, b1_ref, w2_ref, b2_ref, w3_ref, b3_ref,
               w4_ref, b4_ref, o_ref):
    # x tile arrives already cast to the matmul dtype (bf16); accumulate in f32.
    x = x_ref[...]

    def mm(a, w_ref):
        return jnp.dot(a.astype(w_ref.dtype), w_ref[...],
                       preferred_element_type=jnp.float32)

    h1 = _leaky_relu(mm(x, w1_ref) + b1_ref[...])
    h2 = _leaky_relu(mm(h1, w2_ref) + b2_ref[...])
    h3 = _leaky_relu(mm(h2, w3_ref) + b3_ref[...] + h1)   # residual from h1
    y = mm(h3, w4_ref) + b4_ref[...]

    o_ref[...] = y.astype(o_ref.dtype)


def _default_block_b(batch):
    """Pick a batch tile: fill the MXU M dim, and give >=2 grid tiles when the
    batch allows so v7x's two TensorCores both get work."""
    b = _round_up(batch, 8)
    if b > 512:
        return 256
    if b >= 16 and b % 16 == 0:
        return b // 2
    return b


@functools.partial(
    jax.jit, static_argnames=("n_out", "block_b", "single_buffer_params"))
def mlp_forward(x, params, *, n_out, block_b=None, single_buffer_params=True):
    """Run the 4-layer MLP forward pass with one Pallas TPU kernel.

    x: (B, n_in) float32.  params: output of prepare_params() — weights stored
    as (in, out) in bf16 with feature dims padded to lane multiples, biases as
    (1, out) in f32.  Returns (B, n_out) float32.
    """
    w1, b1 = params["w1"], params["b1"]
    w2, b2 = params["w2"], params["b2"]
    w3, b3 = params["w3"], params["b3"]
    w4, b4 = params["w4"], params["b4"]

    B, n_in = x.shape
    n_in_pad = w1.shape[0]
    n_out_pad = w4.shape[1]

    if block_b is None:
        block_b = _default_block_b(B)
    block_b = _round_up(block_b, 8)
    b_pad = _round_up(B, block_b)

    # Cheap layout plumbing: cast x to the matmul dtype and zero-pad batch /
    # feature dims (the zero rows/cols are sliced off below).
    x = x.astype(w1.dtype)
    x = jnp.pad(x, ((0, b_pad - B), (0, n_in_pad - n_in)))

    grid = (b_pad // block_b,)

    x_spec = pl.BlockSpec((block_b, n_in_pad), lambda i: (i, 0))
    o_spec = pl.BlockSpec((block_b, n_out_pad), lambda i: (i, 0))

    def whole(shape):
        kwargs = {}
        if single_buffer_params:
            # Block index never changes across the grid -> no double buffering.
            kwargs["pipeline_mode"] = pl.Buffered(1)
        return pl.BlockSpec(shape, lambda i: tuple(0 for _ in shape), **kwargs)

    out = pl.pallas_call(
        mlp_kernel,
        out_shape=jax.ShapeDtypeStruct((b_pad, n_out_pad), jnp.float32),
        grid_spec=pltpu.PrefetchScalarGridSpec(
            num_scalar_prefetch=0,
            grid=grid,
            in_specs=[
                x_spec,
                whole(w1.shape), whole(b1.shape),
                whole(w2.shape), whole(b2.shape),
                whole(w3.shape), whole(b3.shape),
                whole(w4.shape), whole(b4.shape),
            ],
            out_specs=o_spec,
        ),
        compiler_params=pltpu.CompilerParams(
            dimension_semantics=("parallel",),
            vmem_limit_bytes=32 * 1024 * 1024),
    )(x, w1, b1, w2, b2, w3, b3, w4, b4)

    return out[:B, :n_out]


def init_params(key, n_in, n_unit, n_out, dtype=jnp.float32):
    """PyTorch Linear-like uniform init.  Weights stored as (in, out); biases
    as (1, out)."""
    params = {}
    dims = [(n_in, n_unit), (n_unit, n_unit), (n_unit, n_unit), (n_unit, n_out)]
    for idx, (fan_in, fan_out) in enumerate(dims, start=1):
        key, kw, kb = jax.random.split(key, 3)
        bound = 1.0 / (fan_in ** 0.5)
        params[f"w{idx}"] = jax.random.uniform(
            kw, (fan_in, fan_out), dtype=dtype, minval=-bound, maxval=bound)
        params[f"b{idx}"] = jax.random.uniform(
            kb, (1, fan_out), dtype=dtype, minval=-bound, maxval=bound)
    return params


def prepare_params(params, *, weight_dtype=jnp.bfloat16, lane=LANE):
    """Pad feature dims to lane multiples and cast weights to weight_dtype.

    Zero-padding extra input rows of W1 and extra output columns of W4/b4
    leaves the math unchanged; the wrapper slices the padded outputs off.
    """
    p = dict(params)
    n_in = p["w1"].shape[0]
    n_out = p["w4"].shape[1]
    n_in_pad = _round_up(n_in, lane)
    n_out_pad = _round_up(n_out, lane)
    p["w1"] = jnp.pad(p["w1"], ((0, n_in_pad - n_in), (0, 0)))
    p["w4"] = jnp.pad(p["w4"], ((0, 0), (0, n_out_pad - n_out)))
    p["b4"] = jnp.pad(p["b4"], ((0, 0), (0, n_out_pad - n_out)))
    for k in ("w1", "w2", "w3", "w4"):
        p[k] = p[k].astype(weight_dtype)
    for k in ("b1", "b2", "b3", "b4"):
        p[k] = p[k].astype(jnp.float32)
    return p


def mlp_reference(x, prepared, n_out):
    """Plain-JAX reference mirroring the kernel's mixed-precision math."""
    n_in = x.shape[1]
    xp = jnp.pad(x.astype(prepared["w1"].dtype),
                 ((0, 0), (0, prepared["w1"].shape[0] - n_in)))

    def mm(a, w):
        return jnp.dot(a.astype(w.dtype), w, preferred_element_type=jnp.float32)

    h1 = _leaky_relu(mm(xp, prepared["w1"]) + prepared["b1"])
    h2 = _leaky_relu(mm(h1, prepared["w2"]) + prepared["b2"])
    h3 = _leaky_relu(mm(h2, prepared["w3"]) + prepared["b3"] + h1)
    y = mm(h3, prepared["w4"]) + prepared["b4"]
    return y[:, :n_out]


if __name__ == "__main__":
    # Small shapes consistent with the module: mode='generator' -> n_out = n_in // 2.
    batch = 32
    n_in = 34          # must be even (module contract)
    n_unit = 256       # reduced from the module default 1024 for a quick run
    n_out = n_in // 2  # 17

    key = jax.random.PRNGKey(0)
    key, kx = jax.random.split(key)
    x = jax.random.normal(kx, (batch, n_in), dtype=jnp.float32)

    raw_params = init_params(key, n_in, n_unit, n_out)
    params = prepare_params(raw_params)

    try:
        out = jax.block_until_ready(mlp_forward(x, params, n_out=n_out))
    except Exception:
        # Fallback for Pallas versions without BlockSpec(pipeline_mode=...):
        # use default double-buffered parameter blocks.
        out = jax.block_until_ready(
            mlp_forward(x, params, n_out=n_out, single_buffer_params=False))

    ref = mlp_reference(x, params, n_out)
    assert out.shape == (batch, n_out), out.shape
    assert jnp.allclose(out, ref, atol=1e-2, rtol=1e-2), "mismatch vs reference"

    print("KERNEL_OK")
</pallas_src>

<mosaic_0001>
module attributes {stable_mosaic.version = 11 : i64} {
  func.func @mlp_kernel(%arg0: i32, %arg1: memref<16x128xbf16, #tpu.memory_space<vmem>>, %arg2: memref<128x256xbf16, #tpu.memory_space<vmem>>, %arg3: memref<1x256xf32, #tpu.memory_space<vmem>>, %arg4: memref<256x256xbf16, #tpu.memory_space<vmem>>, %arg5: memref<1x256xf32, #tpu.memory_space<vmem>>, %arg6: memref<256x256xbf16, #tpu.memory_space<vmem>>, %arg7: memref<1x256xf32, #tpu.memory_space<vmem>>, %arg8: memref<256x128xbf16, #tpu.memory_space<vmem>>, %arg9: memref<1x128xf32, #tpu.memory_space<vmem>>, %arg10: memref<16x128xf32, #tpu.memory_space<vmem>>) attributes {dimension_semantics = [#tpu.dimension_semantics<parallel>], iteration_bounds = array<i64: 2>, scalar_prefetch = 0 : i64, scratch_operands = 0 : i64, tpu.core_type = #tpu.core_type<tc>, window_params = [{transform_indices = @transform_0, window_bounds = array<i64: 16, 128>}, {pipeline_mode = #tpu.pipeline_mode<synchronous>, transform_indices = @transform_1, window_bounds = array<i64: 128, 256>}, {pipeline_mode = #tpu.pipeline_mode<synchronous>, transform_indices = @transform_2, window_bounds = array<i64: 1, 256>}, {pipeline_mode = #tpu.pipeline_mode<synchronous>, transform_indices = @transform_3, window_bounds = array<i64: 256, 256>}, {pipeline_mode = #tpu.pipeline_mode<synchronous>, transform_indices = @transform_4, window_bounds = array<i64: 1, 256>}, {pipeline_mode = #tpu.pipeline_mode<synchronous>, transform_indices = @transform_5, window_bounds = array<i64: 256, 256>}, {pipeline_mode = #tpu.pipeline_mode<synchronous>, transform_indices = @transform_6, window_bounds = array<i64: 1, 256>}, {pipeline_mode = #tpu.pipeline_mode<synchronous>, transform_indices = @transform_7, window_bounds = array<i64: 256, 128>}, {pipeline_mode = #tpu.pipeline_mode<synchronous>, transform_indices = @transform_8, window_bounds = array<i64: 1, 128>}, {transform_indices = @transform_9, window_bounds = array<i64: 16, 128>}]} {
    %c0 = arith.constant 0 : index
    %c0_0 = arith.constant 0 : index
    %0 = vector.load %arg1[%c0, %c0_0] : memref<16x128xbf16, #tpu.memory_space<vmem>>, vector<16x128xbf16>
    %c0_1 = arith.constant 0 : index
    %c0_2 = arith.constant 0 : index
    %1 = vector.load %arg2[%c0_1, %c0_2] : memref<128x256xbf16, #tpu.memory_space<vmem>>, vector<128x256xbf16>
    %cst = arith.constant dense<0.000000e+00> : vector<16x256xf32>
    %2 = tpu.matmul %0, %1, %cst {dimension_numbers = #tpu.dot_dimension_numbers<[1], [0], [0], [1], [0, 0, 1, 1], [], []>} : vector<16x128xbf16>, vector<128x256xbf16>, vector<16x256xf32> -> vector<16x256xf32>
    %c0_3 = arith.constant 0 : index
    %c0_4 = arith.constant 0 : index
    %3 = vector.load %arg3[%c0_3, %c0_4] : memref<1x256xf32, #tpu.memory_space<vmem>>, vector<1x256xf32>
    %4 = vector.broadcast %3 : vector<1x256xf32> to vector<16x256xf32>
    %5 = arith.addf %2, %4 : vector<16x256xf32>
    %cst_5 = arith.constant 0.000000e+00 : f32
    %6 = vector.broadcast %cst_5 : f32 to vector<16x256xf32>
    %7 = arith.cmpf oge, %5, %6 : vector<16x256xf32>
    %cst_6 = arith.constant 0.00999999977 : f32
    %8 = vector.broadcast %cst_6 : f32 to vector<16x256xf32>
    %9 = arith.mulf %8, %5 : vector<16x256xf32>
    %10 = arith.select %7, %5, %9 : vector<16x256xi1>, vector<16x256xf32>
    %11 = arith.truncf %10 : vector<16x256xf32> to vector<16x256xbf16>
    %c0_7 = arith.constant 0 : index
    %c0_8 = arith.constant 0 : index
    %12 = vector.load %arg4[%c0_7, %c0_8] : memref<256x256xbf16, #tpu.memory_space<vmem>>, vector<256x256xbf16>
    %cst_9 = arith.constant dense<0.000000e+00> : vector<16x256xf32>
    %13 = tpu.matmul %11, %12, %cst_9 {dimension_numbers = #tpu.dot_dimension_numbers<[1], [0], [0], [1], [0, 0, 1, 1], [], []>} : vector<16x256xbf16>, vector<256x256xbf16>, vector<16x256xf32> -> vector<16x256xf32>
    %c0_10 = arith.constant 0 : index
    %c0_11 = arith.constant 0 : index
    %14 = vector.load %arg5[%c0_10, %c0_11] : memref<1x256xf32, #tpu.memory_space<vmem>>, vector<1x256xf32>
    %15 = vector.broadcast %14 : vector<1x256xf32> to vector<16x256xf32>
    %16 = arith.addf %13, %15 : vector<16x256xf32>
    %cst_12 = arith.constant 0.000000e+00 : f32
    %17 = vector.broadcast %cst_12 : f32 to vector<16x256xf32>
    %18 = arith.cmpf oge, %16, %17 : vector<16x256xf32>
    %cst_13 = arith.constant 0.00999999977 : f32
    %19 = vector.broadcast %cst_13 : f32 to vector<16x256xf32>
    %20 = arith.mulf %19, %16 : vector<16x256xf32>
    %21 = arith.select %18, %16, %20 : vector<16x256xi1>, vector<16x256xf32>
    %22 = arith.truncf %21 : vector<16x256xf32> to vector<16x256xbf16>
    %c0_14 = arith.constant 0 : index
    %c0_15 = arith.constant 0 : index
    %23 = vector.load %arg6[%c0_14, %c0_15] : memref<256x256xbf16, #tpu.memory_space<vmem>>, vector<256x256xbf16>
    %cst_16 = arith.constant dense<0.000000e+00> : vector<16x256xf32>
    %24 = tpu.matmul %22, %23, %cst_16 {dimension_numbers = #tpu.dot_dimension_numbers<[1], [0], [0], [1], [0, 0, 1, 1], [], []>} : vector<16x256xbf16>, vector<256x256xbf16>, vector<16x256xf32> -> vector<16x256xf32>
    %c0_17 = arith.constant 0 : index
    %c0_18 = arith.constant 0 : index
    %25 = vector.load %arg7[%c0_17, %c0_18] : memref<1x256xf32, #tpu.memory_space<vmem>>, vector<1x256xf32>
    %26 = vector.broadcast %25 : vector<1x256xf32> to vector<16x256xf32>
    %27 = arith.addf %24, %26 : vector<16x256xf32>
    %28 = arith.addf %27, %10 : vector<16x256xf32>
    %cst_19 = arith.constant 0.000000e+00 : f32
    %29 = vector.broadcast %cst_19 : f32 to vector<16x256xf32>
    %30 = arith.cmpf oge, %28, %29 : vector<16x256xf32>
    %cst_20 = arith.constant 0.00999999977 : f32
    %31 = vector.broadcast %cst_20 : f32 to vector<16x256xf32>
    %32 = arith.mulf %31, %28 : vector<16x256xf32>
    %33 = arith.select %30, %28, %32 : vector<16x256xi1>, vector<16x256xf32>
    %34 = arith.truncf %33 : vector<16x256xf32> to vector<16x256xbf16>
    %c0_21 = arith.constant 0 : index
    %c0_22 = arith.constant 0 : index
    %35 = vector.load %arg8[%c0_21, %c0_22] : memref<256x128xbf16, #tpu.memory_space<vmem>>, vector<256x128xbf16>
    %cst_23 = arith.constant dense<0.000000e+00> : vector<16x128xf32>
    %36 = tpu.matmul %34, %35, %cst_23 {dimension_numbers = #tpu.dot_dimension_numbers<[1], [0], [0], [1], [0, 0, 1, 1], [], []>} : vector<16x256xbf16>, vector<256x128xbf16>, vector<16x128xf32> -> vector<16x128xf32>
    %c0_24 = arith.constant 0 : index
    %c0_25 = arith.constant 0 : index
    %37 = vector.load %arg9[%c0_24, %c0_25] : memref<1x128xf32, #tpu.memory_space<vmem>>, vector<1x128xf32>
    %38 = vector.broadcast %37 : vector<1x128xf32> to vector<16x128xf32>
    %39 = arith.addf %36, %38 : vector<16x128xf32>
    %c0_26 = arith.constant 0 : index
    %c0_27 = arith.constant 0 : index
    %40 = vector.load %arg10[%c0_26, %c0_27] : memref<16x128xf32, #tpu.memory_space<vmem>>, vector<16x128xf32>
    tpu.vector_store %arg10[%c0_26, %c0_27], %39 {strides = array<i32>} : memref<16x128xf32, #tpu.memory_space<vmem>>, vector<16x128xf32>,
    return
  }
  func.func @transform_0(%arg0: i32) -> (i32, i32) {
    %c0_i32 = arith.constant 0 : i32
    %c0_i32_0 = arith.constant 0 : i32
    return %arg0, %c0_i32 : i32, i32
  }
  func.func @transform_1(%arg0: i32) -> (i32, i32) {
    %c0_i32 = arith.constant 0 : i32
    %c0_i32_0 = arith.constant 0 : i32
    %c0_i32_1 = arith.constant 0 : i32
    return %c0_i32, %c0_i32_0 : i32, i32
  }
  func.func @transform_2(%arg0: i32) -> (i32, i32) {
    %c0_i32 = arith.constant 0 : i32
    %c0_i32_0 = arith.constant 0 : i32
    %c0_i32_1 = arith.constant 0 : i32
    return %c0_i32, %c0_i32_0 : i32, i32
  }
  func.func @transform_3(%arg0: i32) -> (i32, i32) {
    %c0_i32 = arith.constant 0 : i32
    %c0_i32_0 = arith.constant 0 : i32
    %c0_i32_1 = arith.constant 0 : i32
    return %c0_i32, %c0_i32_0 : i32, i32
  }
  func.func @transform_4(%arg0: i32) -> (i32, i32) {
    %c0_i32 = arith.constant 0 : i32
    %c0_i32_0 = arith.constant 0 : i32
    %c0_i32_1 = arith.constant 0 : i32
    return %c0_i32, %c0_i32_0 : i32, i32
  }
  func.func @transform_5(%arg0: i32) -> (i32, i32) {
    %c0_i32 = arith.constant 0 : i32
    %c0_i32_0 = arith.constant 0 : i32
    %c0_i32_1 = arith.constant 0 : i32
    return %c0_i32, %c0_i32_0 : i32, i32
  }
  func.func @transform_6(%arg0: i32) -> (i32, i32) {
    %c0_i32 = arith.constant 0 : i32
    %c0_i32_0 = arith.constant 0 : i32
    %c0_i32_1 = arith.constant 0 : i32
    return %c0_i32, %c0_i32_0 : i32, i32
  }
  func.func @transform_7(%arg0: i32) -> (i32, i32) {
    %c0_i32 = arith.constant 0 : i32
    %c0_i32_0 = arith.constant 0 : i32
    %c0_i32_1 = arith.constant 0 : i32
    return %c0_i32, %c0_i32_0 : i32, i32
  }
  func.func @transform_8(%arg0: i32) -> (i32, i32) {
    %c0_i32 = arith.constant 0 : i32
    %c0_i32_0 = arith.constant 0 : i32
    %c0_i32_1 = arith.constant 0 : i32
    return %c0_i32, %c0_i32_0 : i32, i32
  }
  func.func @transform_9(%arg0: i32) -> (i32, i32) {
    %c0_i32 = arith.constant 0 : i32
    %c0_i32_0 = arith.constant 0 : i32
    return %arg0, %c0_i32 : i32, i32
  }
}

module attributes {stable_mosaic.version = 11 : i64} {
  func.func @mlp_kernel(%arg0: i32, %arg1: memref<16x128xbf16, #tpu.memory_space<vmem>>, %arg2: memref<128x256xbf16, #tpu.memory_space<vmem>>, %arg3: memref<1x256xf32, #tpu.memory_space<vmem>>, %arg4: memref<256x256xbf16, #tpu.memory_space<vmem>>, %arg5: memref<1x256xf32, #tpu.memory_space<vmem>>, %arg6: memref<256x256xbf16, #tpu.memory_space<vmem>>, %arg7: memref<1x256xf32, #tpu.memory_space<vmem>>, %arg8: memref<256x128xbf16, #tpu.memory_space<vmem>>, %arg9: memref<1x128xf32, #tpu.memory_space<vmem>>, %arg10: memref<16x128xf32, #tpu.memory_space<vmem>>) attributes {dimension_semantics = [#tpu.dimension_semantics<parallel>], iteration_bounds = array<i64: 2>, scalar_prefetch = 0 : i64, scratch_operands = 0 : i64, tpu.core_type = #tpu.core_type<tc>, window_params = [{transform_indices = @transform_0, window_bounds = array<i64: 16, 128>}, {pipeline_mode = #tpu.pipeline_mode<synchronous>, transform_indices = @transform_1, window_bounds = array<i64: 128, 256>}, {pipeline_mode = #tpu.pipeline_mode<synchronous>, transform_indices = @transform_2, window_bounds = array<i64: 1, 256>}, {pipeline_mode = #tpu.pipeline_mode<synchronous>, transform_indices = @transform_3, window_bounds = array<i64: 256, 256>}, {pipeline_mode = #tpu.pipeline_mode<synchronous>, transform_indices = @transform_4, window_bounds = array<i64: 1, 256>}, {pipeline_mode = #tpu.pipeline_mode<synchronous>, transform_indices = @transform_5, window_bounds = array<i64: 256, 256>}, {pipeline_mode = #tpu.pipeline_mode<synchronous>, transform_indices = @transform_6, window_bounds = array<i64: 1, 256>}, {pipeline_mode = #tpu.pipeline_mode<synchronous>, transform_indices = @transform_7, window_bounds = array<i64: 256, 128>}, {pipeline_mode = #tpu.pipeline_mode<synchronous>, transform_indices = @transform_8, window_bounds = array<i64: 1, 128>}, {transform_indices = @transform_9, window_bounds = array<i64: 16, 128>}]} {
    %c0 = arith.constant 0 : index
    %c0_0 = arith.constant 0 : index
    %0 = vector.load %arg1[%c0, %c0_0] : memref<16x128xbf16, #tpu.memory_space<vmem>>, vector<16x128xbf16>
    %c0_1 = arith.constant 0 : index
    %c0_2 = arith.constant 0 : index
    %1 = vector.load %arg2[%c0_1, %c0_2] : memref<128x256xbf16, #tpu.memory_space<vmem>>, vector<128x256xbf16>
    %cst = arith.constant dense<0.000000e+00> : vector<16x256xf32>
    %2 = tpu.matmul %0, %1, %cst {dimension_numbers = #tpu.dot_dimension_numbers<[1], [0], [0], [1], [0, 0, 1, 1], [], []>} : vector<16x128xbf16>, vector<128x256xbf16>, vector<16x256xf32> -> vector<16x256xf32>
    %c0_3 = arith.constant 0 : index
    %c0_4 = arith.constant 0 : index
    %3 = vector.load %arg3[%c0_3, %c0_4] : memref<1x256xf32, #tpu.memory_space<vmem>>, vector<1x256xf32>
    %4 = vector.broadcast %3 : vector<1x256xf32> to vector<16x256xf32>
    %5 = arith.addf %2, %4 : vector<16x256xf32>
    %cst_5 = arith.constant 0.000000e+00 : f32
    %6 = vector.broadcast %cst_5 : f32 to vector<16x256xf32>
    %7 = arith.cmpf oge, %5, %6 : vector<16x256xf32>
    %cst_6 = arith.constant 0.00999999977 : f32
    %8 = vector.broadcast %cst_6 : f32 to vector<16x256xf32>
    %9 = arith.mulf %8, %5 : vector<16x256xf32>
    %10 = arith.select %7, %5, %9 : vector<16x256xi1>, vector<16x256xf32>
    %11 = arith.truncf %10 : vector<16x256xf32> to vector<16x256xbf16>
    %c0_7 = arith.constant 0 : index
    %c0_8 = arith.constant 0 : index
    %12 = vector.load %arg4[%c0_7, %c0_8] : memref<256x256xbf16, #tpu.memory_space<vmem>>, vector<256x256xbf16>
    %cst_9 = arith.constant dense<0.000000e+00> : vector<16x256xf32>
    %13 = tpu.matmul %11, %12, %cst_9 {dimension_numbers = #tpu.dot_dimension_numbers<[1], [0], [0], [1], [0, 0, 1, 1], [], []>} : vector<16x256xbf16>, vector<256x256xbf16>, vector<16x256xf32> -> vector<16x256xf32>
    %c0_10 = arith.constant 0 : index
    %c0_11 = arith.constant 0 : index
    %14 = vector.load %arg5[%c0_10, %c0_11] : memref<1x256xf32, #tpu.memory_space<vmem>>, vector<1x256xf32>
    %15 = vector.broadcast %14 : vector<1x256xf32> to vector<16x256xf32>
    %16 = arith.addf %13, %15 : vector<16x256xf32>
    %cst_12 = arith.constant 0.000000e+00 : f32
    %17 = vector.broadcast %cst_12 : f32 to vector<16x256xf32>
    %18 = arith.cmpf oge, %16, %17 : vector<16x256xf32>
    %cst_13 = arith.constant 0.00999999977 : f32
    %19 = vector.broadcast %cst_13 : f32 to vector<16x256xf32>
    %20 = arith.mulf %19, %16 : vector<16x256xf32>
    %21 = arith.select %18, %16, %20 : vector<16x256xi1>, vector<16x256xf32>
    %22 = arith.truncf %21 : vector<16x256xf32> to vector<16x256xbf16>
    %c0_14 = arith.constant 0 : index
    %c0_15 = arith.constant 0 : index
    %23 = vector.load %arg6[%c0_14, %c0_15] : memref<256x256xbf16, #tpu.memory_space<vmem>>, vector<256x256xbf16>
    %cst_16 = arith.constant dense<0.000000e+00> : vector<16x256xf32>
    %24 = tpu.matmul %22, %23, %cst_16 {dimension_numbers = #tpu.dot_dimension_numbers<[1], [0], [0], [1], [0, 0, 1, 1], [], []>} : vector<16x256xbf16>, vector<256x256xbf16>, vector<16x256xf32> -> vector<16x256xf32>
    %c0_17 = arith.constant 0 : index
    %c0_18 = arith.constant 0 : index
    %25 = vector.load %arg7[%c0_17, %c0_18] : memref<1x256xf32, #tpu.memory_space<vmem>>, vector<1x256xf32>
    %26 = vector.broadcast %25 : vector<1x256xf32> to vector<16x256xf32>
    %27 = arith.addf %24, %26 : vector<16x256xf32>
    %28 = arith.addf %27, %10 : vector<16x256xf32>
    %cst_19 = arith.constant 0.000000e+00 : f32
    %29 = vector.broadcast %cst_19 : f32 to vector<16x256xf32>
    %30 = arith.cmpf oge, %28, %29 : vector<16x256xf32>
    %cst_20 = arith.constant 0.00999999977 : f32
    %31 = vector.broadcast %cst_20 : f32 to vector<16x256xf32>
    %32 = arith.mulf %31, %28 : vector<16x256xf32>
    %33 = arith.select %30, %28, %32 : vector<16x256xi1>, vector<16x256xf32>
    %34 = arith.truncf %33 : vector<16x256xf32> to vector<16x256xbf16>
    %c0_21 = arith.constant 0 : index
    %c0_22 = arith.constant 0 : index
    %35 = vector.load %arg8[%c0_21, %c0_22] : memref<256x128xbf16, #tpu.memory_space<vmem>>, vector<256x128xbf16>
    %cst_23 = arith.constant dense<0.000000e+00> : vector<16x128xf32>
    %36 = tpu.matmul %34, %35, %cst_23 {dimension_numbers = #tpu.dot_dimension_numbers<[1], [0], [0], [1], [0, 0, 1, 1], [], []>} : vector<16x256xbf16>, vector<256x128xbf16>, vector<16x128xf32> -> vector<16x128xf32>
    %c0_24 = arith.constant 0 : index
    %c0_25 = arith.constant 0 : index
    %37 = vector.load %arg9[%c0_24, %c0_25] : memref<1x128xf32, #tpu.memory_space<vmem>>, vector<1x128xf32>
    %38 = vector.broadcast %37 : vector<1x128xf32> to vector<16x128xf32>
    %39 = arith.addf %36, %38 : vector<16x128xf32>
    %c0_26 = arith.constant 0 : index
    %c0_27 = arith.constant 0 : index
    %40 = vector.load %arg10[%c0_26, %c0_27] : memref<16x128xf32, #tpu.memory_space<vmem>>, vector<16x128xf32>
    tpu.vector_store %arg10[%c0_26, %c0_27], %39 {strides = array<i32>} : memref<16x128xf32, #tpu.memory_space<vmem>>, vector<16x128xf32>,
    return
  }
  func.func @transform_0(%arg0: i32) -> (i32, i32) {
    %c0_i32 = arith.constant 0 : i32
    %c0_i32_0 = arith.constant 0 : i32
    return %arg0, %c0_i32 : i32, i32
  }
  func.func @transform_1(%arg0: i32) -> (i32, i32) {
    %c0_i32 = arith.constant 0 : i32
    %c0_i32_0 = arith.constant 0 : i32
    %c0_i32_1 = arith.constant 0 : i32
    return %c0_i32, %c0_i32_0 : i32, i32
  }
  func.func @transform_2(%arg0: i32) -> (i32, i32) {
    %c0_i32 = arith.constant 0 : i32
    %c0_i32_0 = arith.constant 0 : i32
    %c0_i32_1 = arith.constant 0 : i32
    return %c0_i32, %c0_i32_0 : i32, i32
  }
  func.func @transform_3(%arg0: i32) -> (i32, i32) {
    %c0_i32 = arith.constant 0 : i32
    %c0_i32_0 = arith.constant 0 : i32
    %c0_i32_1 = arith.constant 0 : i32
    return %c0_i32, %c0_i32_0 : i32, i32
  }
  func.func @transform_4(%arg0: i32) -> (i32, i32) {
    %c0_i32 = arith.constant 0 : i32
    %c0_i32_0 = arith.constant 0 : i32
    %c0_i32_1 = arith.constant 0 : i32
    return %c0_i32, %c0_i32_0 : i32, i32
  }
  func.func @transform_5(%arg0: i32) -> (i32, i32) {
    %c0_i32 = arith.constant 0 : i32
    %c0_i32_0 = arith.constant 0 : i32
    %c0_i32_1 = arith.constant 0 : i32
    return %c0_i32, %c0_i32_0 : i32, i32
  }
  func.func @transform_6(%arg0: i32) -> (i32, i32) {
    %c0_i32 = arith.constant 0 : i32
    %c0_i32_0 = arith.constant 0 : i32
    %c0_i32_1 = arith.constant 0 : i32
    return %c0_i32, %c0_i32_0 : i32, i32
  }
  func.func @transform_7(%arg0: i32) -> (i32, i32) {
    %c0_i32 = arith.constant 0 : i32
    %c0_i32_0 = arith.constant 0 : i32
    %c0_i32_1 = arith.constant 0 : i32
    return %c0_i32, %c0_i32_0 : i32, i32
  }
  func.func @transform_8(%arg0: i32) -> (i32, i32) {
    %c0_i32 = arith.constant 0 : i32
    %c0_i32_0 = arith.constant 0 : i32
    %c0_i32_1 = arith.constant 0 : i32
    return %c0_i32, %c0_i32_0 : i32, i32
  }
  func.func @transform_9(%arg0: i32) -> (i32, i32) {
    %c0_i32 = arith.constant 0 : i32
    %c0_i32_0 = arith.constant 0 : i32
    return %arg0, %c0_i32 : i32, i32
  }
}

</mosaic_0001>

<llo_original>
// kernel: mlp_forward.1
$region0: #{mlp_forward.1}
  #allocation0 [shape = 'u32[]', space=smem, size = 0x4, offset = 0x4, fixed_abs, tag = 'smem constant byte address 0x4 - core index']
  #allocation1 [shape = 'u32[72,128]{1,0:T(1,128)}', space=vmem, size = 0x9000, scoped, tag = 'internal scratch']
  %s0 = inlined_call_operand.vmem [shape: bf16[32,128], index: 0, kind: input, shape index: {}]
  %s1 = inlined_call_operand.hbm [shape: bf16[128,256], index: 1, kind: input, shape index: {}]
  %s2 = inlined_call_operand.vmem [shape: f32[1,256], index: 2, kind: input, shape index: {}]
  %s3 = inlined_call_operand.hbm [shape: bf16[256,256], index: 3, kind: input, shape index: {}]
  %s4 = inlined_call_operand.vmem [shape: f32[1,256], index: 4, kind: input, shape index: {}]
  %s5 = inlined_call_operand.hbm [shape: bf16[256,256], index: 5, kind: input, shape index: {}]
  %s6 = inlined_call_operand.vmem [shape: f32[1,256], index: 6, kind: input, shape index: {}]
  %s7 = inlined_call_operand.hbm [shape: bf16[256,128], index: 7, kind: input, shape index: {}]
  %s8 = inlined_call_operand.vmem [shape: f32[1,128], index: 8, kind: input, shape index: {}]
  %s9 = inlined_call_operand.vmem [shape: f32[32,128], index: 9, kind: output, shape index: {}]
  %s10 = sld [smem:[#allocation0]]
  $region85: #{mlp_forward.1} parent=0
    _
  %s12 = ssub.s32 1, %s10
  %s13 = scalar_select 0, %s12, %s10
  $region1: #{mlp_forward.1} parent=0
    #allocation2 [shape = 'u8[65536]{0}', space=vmem, size = 0x10000, scoped, tag = 'input window, operand 1, single buffered']
    #allocation3 [shape = 's32[2]{0}', space=sflag, size = 0x8, scoped, tag = 'scoped memory for mlp_forward.1']
    #allocation4 [shape = 'u8[131072]{0}', space=vmem, size = 0x20000, scoped, tag = 'input window, operand 3, single buffered']
    #allocation5 [shape = 's32[1]{0}', space=sflag, size = 0x4, scoped, tag = 'scoped memory for mlp_forward.1']
    #allocation6 [shape = 'u8[131072]{0}', space=vmem, size = 0x20000, scoped, tag = 'input window, operand 5, single buffered']
    #allocation7 [shape = 'u8[65536]{0}', space=vmem, size = 0x10000, scoped, tag = 'input window, operand 7, single buffered']
    #allocation8 [shape = 's32[1]{0}', space=sflag, size = 0x4, scoped, tag = 'scoped memory for mlp_forward.1']
    %14 = vsyncpa [#allocation3], 0
    %15 = vsyncpa [#allocation5], 0
    %16 = vsyncpa [#allocation8], 0
    loop: start=0, step=1, limit=4
    $region2: #{mlp_forward.1} parent=1 // loop_pre_header
      _
    $region3: #{mlp_forward.1} parent=1 // loop_header
      %s18 = sphi 0, %s22
      %p19 = scmp.ge.s32.totalorder %s18, 4
      %s28 = sphi 0, %s30
      %s31 = sphi 0, %s28
      %s32 = sphi 0, %s31
      %s48 = sphi 0, %s32
      %s52 = sphi 0, %s52
      %s54 = sphi 0, %s52
      %s55 = sphi 0, %s54
      %s69 = sphi 0, %s55
      %s73 = sphi 0, %s73
      %s75 = sphi 0, %s73
      %s76 = sphi 0, %s75
      %s90 = sphi 0, %s76
      %s94 = sphi 0, %s94
      %s96 = sphi 0, %s94
      %s97 = sphi 0, %s96
      %s111 = sphi 0, %s97
      %s115 = sphi 0, %s115
      %s117 = sphi 0, %s115
      %s118 = sphi 0, %s117
      %s132 = sphi 0, %s118
      %s136 = sphi 0, %s136
      %s138 = sphi 0, %s136
      %s139 = sphi 0, %s138
      %s153 = sphi 0, %s139
      %s157 = sphi 0, %s157
      %s159 = sphi 0, %s157
      %s160 = sphi 0, %s159
      %s174 = sphi 0, %s160
      %s178 = sphi 0, %s178
      %s180 = sphi 0, %s178
      %s181 = sphi 0, %s180
      %s195 = sphi 0, %s181
      %s199 = sphi 0, %s199
      %s201 = sphi 0, %s199
      %s202 = sphi 0, %s201
      %s216 = sphi 0, %s202
      %s222 = sphi 0, %s224
      %s225 = sphi 0, %s222
      %s226 = sphi 0, %s225
      %s242 = sphi 0, %s226
    $region4: #{mlp_forward.1} parent=1 // loop_header_branch
      %21 = sbr.rel (%p19) target = $region8
    $region5: #{mlp_forward.1} parent=1 // loop_body
      %s23 = ssub.s32 %s18, 1
      %s24 = ssub.s32 %s18, 2
      %s25 = sadd.s32 %s18, 1
      %s26 = ssub.s32 %s18, %s25
      %p27 = scmp.eq.s32.totalorder %s26, 0
      %s29 = sadd.s32 %s28, 1
      %s30 = scalar_select %p27, %s28, %s29
      %p33 = pneg %p27
      %p34 = scmp.eq.s32.totalorder %s18, 1
      %p35 = por %p33, %p34
      %p36 = scmp.ne.s32.totalorder %s28, %s31
      %p37 = scmp.eq.s32.totalorder %s18, 0
      %p38 = por %p36, %p37
      %p39 = scmp.ne.s32.totalorder %s28, %s31
      %p40 = scmp.eq.s32.totalorder %s23, 1
      %p41 = por %p39, %p40
      %p42 = scmp.ne.s32.totalorder %s31, %s32
      %p43 = scmp.eq.s32.totalorder %s23, 0
      %p44 = por %p42, %p43
      %p45 = scmp.ne.s32.totalorder %s31, %s32
      %p46 = scmp.eq.s32.totalorder %s24, 1
      %p47 = por %p45, %p46
      %p49 = scmp.ne.s32.totalorder %s32, %s48
      %p50 = scmp.eq.s32.totalorder %s24, 0
      %p51 = por %p49, %p50
      %s53 = sadd.s32 %s52, 1
      %p56 = scmp.eq.s32.totalorder %s18, 1
      %p57 = scmp.ne.s32.totalorder %s52, %s54
      %p58 = scmp.eq.s32.totalorder %s18, 0
      %p59 = por %p57, %p58
      %p60 = scmp.ne.s32.totalorder %s52, %s54
      %p61 = scmp.eq.s32.totalorder %s23, 1
      %p62 = por %p60, %p61
      %p63 = scmp.ne.s32.totalorder %s54, %s55
      %p64 = scmp.eq.s32.totalorder %s23, 0
      %p65 = por %p63, %p64
      %p66 = scmp.ne.s32.totalorder %s54, %s55
      %p67 = scmp.eq.s32.totalorder %s24, 1
      %p68 = por %p66, %p67
      %p70 = scmp.ne.s32.totalorder %s55, %s69
      %p71 = scmp.eq.s32.totalorder %s24, 0
      %p72 = por %p70, %p71
      %s74 = sadd.s32 %s73, 1
      %p77 = scmp.eq.s32.totalorder %s18, 1
      %p78 = scmp.ne.s32.totalorder %s73, %s75
      %p79 = scmp.eq.s32.totalorder %s18, 0
      %p80 = por %p78, %p79
      %p81 = scmp.ne.s32.totalorder %s73, %s75
      %p82 = scmp.eq.s32.totalorder %s23, 1
      %p83 = por %p81, %p82
      %p84 = scmp.ne.s32.totalorder %s75, %s76
      %p85 = scmp.eq.s32.totalorder %s23, 0
      %p86 = por %p84, %p85
      %p87 = scmp.ne.s32.totalorder %s75, %s76
      %p88 = scmp.eq.s32.totalorder %s24, 1
      %p89 = por %p87, %p88
      %p91 = scmp.ne.s32.totalorder %s76, %s90
      %p92 = scmp.eq.s32.totalorder %s24, 0
      %p93 = por %p91, %p92
      %s95 = sadd.s32 %s94, 1
      %p98 = scmp.eq.s32.totalorder %s18, 1
      %p99 = scmp.ne.s32.totalorder %s94, %s96
      %p100 = scmp.eq.s32.totalorder %s18, 0
      %p101 = por %p99, %p100
      %p102 = scmp.ne.s32.totalorder %s94, %s96
      %p103 = scmp.eq.s32.totalorder %s23, 1
      %p104 = por %p102, %p103
      %p105 = scmp.ne.s32.totalorder %s96, %s97
      %p106 = scmp.eq.s32.totalorder %s23, 0
      %p107 = por %p105, %p106
      %p108 = scmp.ne.s32.totalorder %s96, %s97
      %p109 = scmp.eq.s32.totalorder %s24, 1
      %p110 = por %p108, %p109
      %p112 = scmp.ne.s32.totalorder %s97, %s111
      %p113 = scmp.eq.s32.totalorder %s24, 0
      %p114 = por %p112, %p113
      %s116 = sadd.s32 %s115, 1
      %p119 = scmp.eq.s32.totalorder %s18, 1
      %p120 = scmp.ne.s32.totalorder %s115, %s117
      %p121 = scmp.eq.s32.totalorder %s18, 0
      %p122 = por %p120, %p121
      %p123 = scmp.ne.s32.totalorder %s115, %s117
      %p124 = scmp.eq.s32.totalorder %s23, 1
      %p125 = por %p123, %p124
      %p126 = scmp.ne.s32.totalorder %s117, %s118
      %p127 = scmp.eq.s32.totalorder %s23, 0
      %p128 = por %p126, %p127
      %p129 = scmp.ne.s32.totalorder %s117, %s118
      %p130 = scmp.eq.s32.totalorder %s24, 1
      %p131 = por %p129, %p130
      %p133 = scmp.ne.s32.totalorder %s118, %s132
      %p134 = scmp.eq.s32.totalorder %s24, 0
      %p135 = por %p133, %p134
      %s137 = sadd.s32 %s136, 1
      %p140 = scmp.eq.s32.totalorder %s18, 1
      %p141 = scmp.ne.s32.totalorder %s136, %s138
      %p142 = scmp.eq.s32.totalorder %s18, 0
      %p143 = por %p141, %p142
      %p144 = scmp.ne.s32.totalorder %s136, %s138
      %p145 = scmp.eq.s32.totalorder %s23, 1
      %p146 = por %p144, %p145
      %p147 = scmp.ne.s32.totalorder %s138, %s139
      %p148 = scmp.eq.s32.totalorder %s23, 0
      %p149 = por %p147, %p148
      %p150 = scmp.ne.s32.totalorder %s138, %s139
      %p151 = scmp.eq.s32.totalorder %s24, 1
      %p152 = por %p150, %p151
      %p154 = scmp.ne.s32.totalorder %s139, %s153
      %p155 = scmp.eq.s32.totalorder %s24, 0
      %p156 = por %p154, %p155
      %s158 = sadd.s32 %s157, 1
      %p161 = scmp.eq.s32.totalorder %s18, 1
      %p162 = scmp.ne.s32.totalorder %s157, %s159
      %p163 = scmp.eq.s32.totalorder %s18, 0
      %p164 = por %p162, %p163
      %p165 = scmp.ne.s32.totalorder %s157, %s159
      %p166 = scmp.eq.s32.totalorder %s23, 1
      %p167 = por %p165, %p166
      %p168 = scmp.ne.s32.totalorder %s159, %s160
      %p169 = scmp.eq.s32.totalorder %s23, 0
      %p170 = por %p168, %p169
      %p171 = scmp.ne.s32.totalorder %s159, %s160
      %p172 = scmp.eq.s32.totalorder %s24, 1
      %p173 = por %p171, %p172
      %p175 = scmp.ne.s32.totalorder %s160, %s174
      %p176 = scmp.eq.s32.totalorder %s24, 0
      %p177 = por %p175, %p176
      %s179 = sadd.s32 %s178, 1
      %p182 = scmp.eq.s32.totalorder %s18, 1
      %p183 = scmp.ne.s32.totalorder %s178, %s180
      %p184 = scmp.eq.s32.totalorder %s18, 0
      %p185 = por %p183, %p184
      %p186 = scmp.ne.s32.totalorder %s178, %s180
      %p187 = scmp.eq.s32.totalorder %s23, 1
      %p188 = por %p186, %p187
      %p189 = scmp.ne.s32.totalorder %s180, %s181
      %p190 = scmp.eq.s32.totalorder %s23, 0
      %p191 = por %p189, %p190
      %p192 = scmp.ne.s32.totalorder %s180, %s181
      %p193 = scmp.eq.s32.totalorder %s24, 1
      %p194 = por %p192, %p193
      %p196 = scmp.ne.s32.totalorder %s181, %s195
      %p197 = scmp.eq.s32.totalorder %s24, 0
      %p198 = por %p196, %p197
      %s200 = sadd.s32 %s199, 1
      %p203 = scmp.eq.s32.totalorder %s18, 1
      %p204 = scmp.ne.s32.totalorder %s199, %s201
      %p205 = scmp.eq.s32.totalorder %s18, 0
      %p206 = por %p204, %p205
      %p207 = scmp.ne.s32.totalorder %s199, %s201
      %p208 = scmp.eq.s32.totalorder %s23, 1
      %p209 = por %p207, %p208
      %p210 = scmp.ne.s32.totalorder %s201, %s202
      %p211 = scmp.eq.s32.totalorder %s23, 0
      %p212 = por %p210, %p211
      %p213 = scmp.ne.s32.totalorder %s201, %s202
      %p214 = scmp.eq.s32.totalorder %s24, 1
      %p215 = por %p213, %p214
      %p217 = scmp.ne.s32.totalorder %s202, %s216
      %p218 = scmp.eq.s32.totalorder %s24, 0
      %p219 = por %p217, %p218
      %s220 = ssub.s32 %s18, %s25
      %p221 = scmp.eq.s32.totalorder %s220, 0
      %s223 = sadd.s32 %s222, 1
      %s224 = scalar_select %p221, %s222, %s223
      %p227 = pneg %p221
      %p228 = scmp.eq.s32.totalorder %s18, 1
      %p229 = por %p227, %p228
      %p230 = scmp.ne.s32.totalorder %s222, %s225
      %p231 = scmp.eq.s32.totalorder %s18, 0
      %p232 = por %p230, %p231
      %p233 = scmp.ne.s32.totalorder %s222, %s225
      %p234 = scmp.eq.s32.totalorder %s23, 1
      %p235 = por %p233, %p234
      %p236 = scmp.ne.s32.totalorder %s225, %s226
      %p237 = scmp.eq.s32.totalorder %s23, 0
      %p238 = por %p236, %p237
      %p239 = scmp.ne.s32.totalorder %s225, %s226
      %p240 = scmp.eq.s32.totalorder %s24, 1
      %p241 = por %p239, %p240
      %p243 = scmp.ne.s32.totalorder %s226, %s242
      %p244 = scmp.eq.s32.totalorder %s24, 0
      %p245 = por %p243, %p244
      %p246 = scmp.le.s32.totalorder 1, %s18
      %p247 = scmp.lt.s32.totalorder %s18, 3
      %p248 = pnand %p246, %p247
      %p249 = pneg %p248
      // Predicated region
      $region9: #{mlp_forward.1} parent=5 // pred_check
        _
      $region10: #{mlp_forward.1} parent=5 // pred_check_branch
        %251 = sbr.rel (%p248) target = $region12
      $region11: #{mlp_forward.1} parent=5 // pred_region
        %s252 = ssub.s32 %s18, 1
        // Predicated region
        $region13: #{mlp_forward.1} parent=11 // pred_check
          %p253 = pneg %p65
        $region14: #{mlp_forward.1} parent=11 // pred_check_branch
          %255 = sbr.rel (%p253) target = $region16
        $region15: #{mlp_forward.1} parent=11 // pred_region
          %257 = vsyncadd [#allocation3], 0
          %s258 = sshll.u32 %s1, 4
          %s259 = int_to_ptr.hbm [resolvable:$true] %s258
          %s260 = sshll.u32 [#allocation2], 4
          %s261 = int_to_ptr.vmem [resolvable:$true] %s260
          %266 = dma.hbm_to_vmem [thread:$0]  %s259, 2048, %s261, [#allocation3], 128, 128, 8
        $region16: #{mlp_forward.1} parent=11 // pred_fallthru
          _
        // Predicated region
        $region17: #{mlp_forward.1} parent=11 // pred_check
          %p267 = pneg %p86
        $region18: #{mlp_forward.1} parent=11 // pred_check_branch
          %269 = sbr.rel (%p267) target = $region20
        $region19: #{mlp_forward.1} parent=11 // pred_region
          _
        $region20: #{mlp_forward.1} parent=11 // pred_fallthru
          _
        // Predicated region
        $region21: #{mlp_forward.1} parent=11 // pred_check
          %p270 = pneg %p107
        $region22: #{mlp_forward.1} parent=11 // pred_check_branch
          %272 = sbr.rel (%p270) target = $region24
        $region23: #{mlp_forward.1} parent=11 // pred_region
          %274 = vsyncadd [#allocation5], 0
          %s275 = sshll.u32 %s3, 4
          %s276 = int_to_ptr.hbm [resolvable:$true] %s275
          %s277 = sshll.u32 [#allocation4], 4
          %s278 = int_to_ptr.vmem [resolvable:$true] %s277
          %283 = dma.hbm_to_vmem [thread:$0]  %s276, 4096, %s278, [#allocation5], 128, 128, 8
        $region24: #{mlp_forward.1} parent=11 // pred_fallthru
          _
        // Predicated region
        $region25: #{mlp_forward.1} parent=11 // pred_check
          %p284 = pneg %p128
        $region26: #{mlp_forward.1} parent=11 // pred_check_branch
          %286 = sbr.rel (%p284) target = $region28
        $region27: #{mlp_forward.1} parent=11 // pred_region
          _
        $region28: #{mlp_forward.1} parent=11 // pred_fallthru
          _
        // Predicated region
        $region29: #{mlp_forward.1} parent=11 // pred_check
          %p287 = pneg %p149
        $region30: #{mlp_forward.1} parent=11 // pred_check_branch
          %289 = sbr.rel (%p287) target = $region32
        $region31: #{mlp_forward.1} parent=11 // pred_region
          %291 = vsyncadd [#allocation5], 0
          %s292 = sshll.u32 %s5, 4
          %s293 = int_to_ptr.hbm [resolvable:$true] %s292
          %s294 = sshll.u32 [#allocation6], 4
          %s295 = int_to_ptr.vmem [resolvable:$true] %s294
          %300 = dma.hbm_to_vmem [thread:$0]  %s293, 4096, %s295, [#allocation5], 128, 128, 8
        $region32: #{mlp_forward.1} parent=11 // pred_fallthru
          _
        // Predicated region
        $region33: #{mlp_forward.1} parent=11 // pred_check
          %p301 = pneg %p170
        $region34: #{mlp_forward.1} parent=11 // pred_check_branch
          %303 = sbr.rel (%p301) target = $region36
        $region35: #{mlp_forward.1} parent=11 // pred_region
          _
        $region36: #{mlp_forward.1} parent=11 // pred_fallthru
          _
        // Predicated region
        $region37: #{mlp_forward.1} parent=11 // pred_check
          %p304 = pneg %p191
        $region38: #{mlp_forward.1} parent=11 // pred_check_branch
          %306 = sbr.rel (%p304) target = $region40
        $region39: #{mlp_forward.1} parent=11 // pred_region
          %308 = vsyncadd [#allocation8], 0
          %s309 = sshll.u32 %s7, 4
          %s310 = int_to_ptr.hbm [resolvable:$true] %s309
          %s311 = sshll.u32 [#allocation7], 4
          %s312 = int_to_ptr.vmem [resolvable:$true] %s311
          %317 = dma.hbm_to_vmem [thread:$0]  %s310, 2048, %s312, [#allocation8], 64, 64, 4
        $region40: #{mlp_forward.1} parent=11 // pred_fallthru
          _
        // Predicated region
        $region41: #{mlp_forward.1} parent=11 // pred_check
          %p318 = pneg %p212
        $region42: #{mlp_forward.1} parent=11 // pred_check_branch
          %320 = sbr.rel (%p318) target = $region44
        $region43: #{mlp_forward.1} parent=11 // pred_region
          _
        $region44: #{mlp_forward.1} parent=11 // pred_fallthru
          _
      $region12: #{mlp_forward.1} parent=5 // pred_fallthru
        _
      %p321 = scmp.lt.s32.totalorder %s18, 2
      // Predicated region
      $region45: #{mlp_forward.1} parent=5 // pred_check
        %p322 = pneg %p321
      $region46: #{mlp_forward.1} parent=5 // pred_check_branch
        %324 = sbr.rel (%p322) target = $region48
      $region47: #{mlp_forward.1} parent=5 // pred_region
        // Predicated region
        $region49: #{mlp_forward.1} parent=47 // pred_check
          %p325 = pneg %p38
        $region50: #{mlp_forward.1} parent=47 // pred_check_branch
          %327 = sbr.rel (%p325) target = $region52
        $region51: #{mlp_forward.1} parent=47 // pred_region
          %s328 = smul.u32 2, %s18
          %p329 = scmp.lt.s32.totalorder %s328, 3
          %s330 = scalar_select %p329, %s328, 3
          %s331 = smul.addr %s330, 4
          %s332 = scalar_lea.vmem %s0, %s331
          %s333 = smul.u32 2, %s18
        $region52: #{mlp_forward.1} parent=47 // pred_fallthru
          _
      $region48: #{mlp_forward.1} parent=5 // pred_fallthru
        _
      %p334 = scmp.le.s32.totalorder 1, %s18
      %p335 = scmp.lt.s32.totalorder %s18, 3
      %p336 = pnand %p334, %p335
      %p337 = pneg %p336
      // Predicated region
      $region53: #{mlp_forward.1} parent=5 // pred_check
        _
      $region54: #{mlp_forward.1} parent=5 // pred_check_branch
        %339 = sbr.rel (%p336) target = $region56
      $region55: #{mlp_forward.1} parent=5 // pred_region
        %s340 = ssub.s32 %s18, 1
        // Predicated region
        $region57: #{mlp_forward.1} parent=55 // pred_check
          %p341 = pneg %p65
        $region58: #{mlp_forward.1} parent=55 // pred_check_branch
          %343 = sbr.rel (%p341) target = $region60
        $region59: #{mlp_forward.1} parent=55 // pred_region
          %345 = dma.done [#allocation3], 2048
        $region60: #{mlp_forward.1} parent=55 // pred_fallthru
          _
        // Predicated region
        $region61: #{mlp_forward.1} parent=55 // pred_check
          %p346 = pneg %p107
        $region62: #{mlp_forward.1} parent=55 // pred_check_branch
          %348 = sbr.rel (%p346) target = $region64
        $region63: #{mlp_forward.1} parent=55 // pred_region
          %350 = dma.done [#allocation5], 4096
        $region64: #{mlp_forward.1} parent=55 // pred_fallthru
          _
        // Predicated region
        $region65: #{mlp_forward.1} parent=55 // pred_check
          %p351 = pneg %p149
        $region66: #{mlp_forward.1} parent=55 // pred_check_branch
          %353 = sbr.rel (%p351) target = $region68
        $region67: #{mlp_forward.1} parent=55 // pred_region
          %355 = dma.done [#allocation5], 4096
        $region68: #{mlp_forward.1} parent=55 // pred_fallthru
          _
        // Predicated region
        $region69: #{mlp_forward.1} parent=55 // pred_check
          %p356 = pneg %p191
        $region70: #{mlp_forward.1} parent=55 // pred_check_branch
          %358 = sbr.rel (%p356) target = $region72
        $region71: #{mlp_forward.1} parent=55 // pred_region
          %360 = dma.done [#allocation8], 2048
        $region72: #{mlp_forward.1} parent=55 // pred_fallthru
          _
        %s361 = smul.u32 2, %s23
        %p362 = scmp.lt.s32.totalorder %s361, 3
        %s363 = scalar_select %p362, %s361, 3
        %s364 = smul.addr %s363, 4
        %s365 = scalar_lea.vmem %s0, %s364
        %p366 = pneg %p44
        %p367 = pneg %p41
        %p368 = pneg %p65
        %p369 = pneg %p62
        %p370 = pneg %p86
        %p371 = pneg %p83
        %p372 = pneg %p107
        %p373 = pneg %p104
        %p374 = pneg %p128
        %p375 = pneg %p125
        %p376 = pneg %p149
        %p377 = pneg %p146
        %p378 = pneg %p170
        %p379 = pneg %p167
        %p380 = pneg %p191
        %p381 = pneg %p188
        %p382 = pneg %p212
        %p383 = pneg %p209
        %p384 = pneg %p238
        %p385 = pneg %p235
        %s386 = smul.u32 2, %s23
        %p387 = scmp.lt.s32.totalorder %s386, 3
        %s388 = scalar_select %p387, %s386, 3
        %s389 = smul.addr %s388, 8
        %s390 = scalar_lea.vmem %s9, %s389
        %s391 = smul.u32 2, %s23
        %p392 = scmp.lt.s32.totalorder %s391, 3
        %s393 = scalar_select %p392, %s391, 3
        %s394 = smul.addr %s393, 4
        %s395 = scalar_lea.vmem %s0, %s394
        %s396 = smul.u32 2, %s23
        %s397 = smul.u32 2, %s23
        %p398 = scmp.lt.s32.totalorder %s397, 3
        %s399 = scalar_select %p398, %s397, 3
        %s400 = smul.addr %s399, 8
        %s401 = scalar_lea.vmem %s9, %s400
        %s402 = smul.u32 2, %s23
        %v403 = vld [vmem:[%s395] sm:$0xf]
        %v404 = vld [vmem:[%s395 + $0x4] sm:$0xf]
        %v405 = vld [vmem:[#allocation2] sm:$0xff]
        %v406 = vld [vmem:[#allocation2 + $0x8] sm:$0xff]
        %v407 = vld [vmem:[#allocation2 + $0x10] sm:$0xff]
        %v408 = vld [vmem:[#allocation2 + $0x18] sm:$0xff]
        %v409 = vld [vmem:[#allocation2 + $0x20] sm:$0xff]
        %v410 = vld [vmem:[#allocation2 + $0x28] sm:$0xff]
        %v411 = vld [vmem:[#allocation2 + $0x30] sm:$0xff]
        %v412 = vld [vmem:[#allocation2 + $0x38] sm:$0xff]
        %v413 = vld [vmem:[#allocation2 + $0x40] sm:$0xff]
        %v414 = vld [vmem:[#allocation2 + $0x48] sm:$0xff]
        %v415 = vld [vmem:[#allocation2 + $0x50] sm:$0xff]
        %v416 = vld [vmem:[#allocation2 + $0x58] sm:$0xff]
        %v417 = vld [vmem:[#allocation2 + $0x60] sm:$0xff]
        %v418 = vld [vmem:[#allocation2 + $0x68] sm:$0xff]
        %v419 = vld [vmem:[#allocation2 + $0x70] sm:$0xff]
        %v420 = vld [vmem:[#allocation2 + $0x78] sm:$0xff]
        %v421 = vld [vmem:[%s2] sm:$0x3]
        %v423 = vperm.slane %v421, 0
        %v424 = vperm.slane %v421, 1
        %v429 = vunpack.c.l.b16 %v403
        %v430 = vunpack.c.l.b16 %v404
        %v431 = vpack.c.b16 %v430, %v429
        %v449 = vunpack.c.l.b16 %v405
        %v450 = vunpack.c.h.b16 %v405
        %v451 = vunpack.c.l.b16 %v406
        %v452 = vunpack.c.h.b16 %v406
        %v453 = vunpack.c.l.b16 %v407
        %v454 = vunpack.c.h.b16 %v407
        %v455 = vunpack.c.l.b16 %v408
        %v456 = vunpack.c.h.b16 %v408
        %v457 = vunpack.c.l.b16 %v409
        %v458 = vunpack.c.h.b16 %v409
        %v459 = vunpack.c.l.b16 %v410
        %v460 = vunpack.c.h.b16 %v410
        %v461 = vunpack.c.l.b16 %v411
        %v462 = vunpack.c.h.b16 %v411
        %v463 = vunpack.c.l.b16 %v412
        %v464 = vunpack.c.h.b16 %v412
        %v465 = vunpack.c.l.b16 %v413
        %v466 = vunpack.c.h.b16 %v413
        %v467 = vunpack.c.l.b16 %v414
        %v468 = vunpack.c.h.b16 %v414
        %v469 = vunpack.c.l.b16 %v415
        %v470 = vunpack.c.h.b16 %v415
        %v471 = vunpack.c.l.b16 %v416
        %v472 = vunpack.c.h.b16 %v416
        %v473 = vunpack.c.l.b16 %v417
        %v474 = vunpack.c.h.b16 %v417
        %v475 = vunpack.c.l.b16 %v418
        %v476 = vunpack.c.h.b16 %v418
        %v477 = vunpack.c.l.b16 %v419
        %v478 = vunpack.c.h.b16 %v419
        %v479 = vunpack.c.l.b16 %v420
        %v480 = vunpack.c.h.b16 %v420
        %v481 = vpack.c.b16 %v451, %v449
        %v482 = vpack.c.b16 %v452, %v450
        %v483 = vpack.c.b16 %v455, %v453
        %v484 = vpack.c.b16 %v456, %v454
        %v485 = vpack.c.b16 %v459, %v457
        %v486 = vpack.c.b16 %v460, %v458
        %v487 = vpack.c.b16 %v463, %v461
        %v488 = vpack.c.b16 %v464, %v462
        %v489 = vpack.c.b16 %v467, %v465
        %v490 = vpack.c.b16 %v468, %v466
        %v491 = vpack.c.b16 %v471, %v469
        %v492 = vpack.c.b16 %v472, %v470
        %v493 = vpack.c.b16 %v475, %v473
        %v494 = vpack.c.b16 %v476, %v474
        %v495 = vpack.c.b16 %v479, %v477
        %v496 = vpack.c.b16 %v480, %v478
        %513 = vmatpush.bf16.msra.mxu0 %v495
        %514 = vmatpush.bf16.msra.mxu0 %v493
        %515 = vmatpush.bf16.msra.mxu0 %v491
        %516 = vmatpush.bf16.msra.mxu0 %v489
        %517 = vmatpush.bf16.msra.mxu0 %v487
        %518 = vmatpush.bf16.msra.mxu0 %v485
        %519 = vmatpush.bf16.msra.mxu0 %v483
        %520 = vmatpush.bf16.msra.mxu0 %v481
        %521 = vmatmul.bf16.gmra.mxu0 %v431
        %v522 = vpop.f32.mrf.mxu0
        %v523 = vadd.f32 %v423, %v522
        %v524 = vpop.f32.mrf.mxu0
        %v525 = vadd.f32 %v423, %v524
        %526 = vdwg.mxu0
        %527 = vmatpush.bf16.msra.mxu0 %v496
        %528 = vmatpush.bf16.msra.mxu0 %v494
        %529 = vmatpush.bf16.msra.mxu0 %v492
        %530 = vmatpush.bf16.msra.mxu0 %v490
        %531 = vmatpush.bf16.msra.mxu0 %v488
        %532 = vmatpush.bf16.msra.mxu0 %v486
        %533 = vmatpush.bf16.msra.mxu0 %v484
        %534 = vmatpush.bf16.msra.mxu0 %v482
        %535 = vmatmul.bf16.gmra.mxu0 %v431
        %v536 = vpop.f32.mrf.mxu0
        %v537 = vadd.f32 %v424, %v536
        %v538 = vpop.f32.mrf.mxu0
        %v539 = vadd.f32 %v424, %v538
        %540 = vdwg.mxu0
        %vm541 = vcmp.ge.f32.partialorder %v523, 0.0
        %vm542 = vcmp.ge.f32.partialorder %v537, 0.0
        %vm543 = vcmp.ge.f32.partialorder %v525, 0.0
        %vm544 = vcmp.ge.f32.partialorder %v539, 0.0
        %v545 = vmul.f32 %v523, 0.01
        %v546 = vmul.f32 %v537, 0.01
        %v547 = vmul.f32 %v525, 0.01
        %v548 = vmul.f32 %v539, 0.01
        %v549 = vsel %vm541, %v523, %v545
        %v550 = vsel %vm542, %v537, %v546
        %v551 = vsel %vm543, %v525, %v547
        %v552 = vsel %vm544, %v539, %v548
        %v553 = vpack.c.bf16 %v551, %v549
        %v554 = vpack.c.bf16 %v552, %v550
        %v555 = vld [vmem:[#allocation4] sm:$0xff]
        %v556 = vld [vmem:[#allocation4 + $0x8] sm:$0xff]
        %v557 = vld [vmem:[#allocation4 + $0x10] sm:$0xff]
        %v558 = vld [vmem:[#allocation4 + $0x18] sm:$0xff]
        %v559 = vld [vmem:[#allocation4 + $0x20] sm:$0xff]
        %v560 = vld [vmem:[#allocation4 + $0x28] sm:$0xff]
        %v561 = vld [vmem:[#allocation4 + $0x30] sm:$0xff]
        %v562 = vld [vmem:[#allocation4 + $0x38] sm:$0xff]
        %v563 = vld [vmem:[#allocation4 + $0x40] sm:$0xff]
        %v564 = vld [vmem:[#allocation4 + $0x48] sm:$0xff]
        %v565 = vld [vmem:[#allocation4 + $0x50] sm:$0xff]
        %v566 = vld [vmem:[#allocation4 + $0x58] sm:$0xff]
        %v567 = vld [vmem:[#allocation4 + $0x60] sm:$0xff]
        %v568 = vld [vmem:[#allocation4 + $0x68] sm:$0xff]
        %v569 = vld [vmem:[#allocation4 + $0x70] sm:$0xff]
        %v570 = vld [vmem:[#allocation4 + $0x78] sm:$0xff]
        %v571 = vld [vmem:[#allocation4 + $0x80] sm:$0xff]
        %v572 = vld [vmem:[#allocation4 + $0x88] sm:$0xff]
        %v573 = vld [vmem:[#allocation4 + $0x90] sm:$0xff]
        %v574 = vld [vmem:[#allocation4 + $0x98] sm:$0xff]
        %v575 = vld [vmem:[#allocation4 + $0xa0] sm:$0xff]
        %v576 = vld [vmem:[#allocation4 + $0xa8] sm:$0xff]
        %v577 = vld [vmem:[#allocation4 + $0xb0] sm:$0xff]
        %v578 = vld [vmem:[#allocation4 + $0xb8] sm:$0xff]
        %v579 = vld [vmem:[#allocation4 + $0xc0] sm:$0xff]
        %v580 = vld [vmem:[#allocation4 + $0xc8] sm:$0xff]
        %v581 = vld [vmem:[#allocation4 + $0xd0] sm:$0xff]
        %v582 = vld [vmem:[#allocation4 + $0xd8] sm:$0xff]
        %v583 = vld [vmem:[#allocation4 + $0xe0] sm:$0xff]
        %v584 = vld [vmem:[#allocation4 + $0xe8] sm:$0xff]
        %v585 = vld [vmem:[#allocation4 + $0xf0] sm:$0xff]
        %v586 = vld [vmem:[#allocation4 + $0xf8] sm:$0xff]
        %v587 = vld [vmem:[%s4] sm:$0x3]
        %v589 = vperm.slane %v587, 0
        %v590 = vperm.slane %v587, 1
        %v625 = vunpack.c.l.b16 %v555
        %v626 = vunpack.c.h.b16 %v555
        %v627 = vunpack.c.l.b16 %v556
        %v628 = vunpack.c.h.b16 %v556
        %v629 = vunpack.c.l.b16 %v557
        %v630 = vunpack.c.h.b16 %v557
        %v631 = vunpack.c.l.b16 %v558
        %v632 = vunpack.c.h.b16 %v558
        %v633 = vunpack.c.l.b16 %v559
        %v634 = vunpack.c.h.b16 %v559
        %v635 = vunpack.c.l.b16 %v560
        %v636 = vunpack.c.h.b16 %v560
        %v637 = vunpack.c.l.b16 %v561
        %v638 = vunpack.c.h.b16 %v561
        %v639 = vunpack.c.l.b16 %v562
        %v640 = vunpack.c.h.b16 %v562
        %v641 = vunpack.c.l.b16 %v563
        %v642 = vunpack.c.h.b16 %v563
        %v643 = vunpack.c.l.b16 %v564
        %v644 = vunpack.c.h.b16 %v564
        %v645 = vunpack.c.l.b16 %v565
        %v646 = vunpack.c.h.b16 %v565
        %v647 = vunpack.c.l.b16 %v566
        %v648 = vunpack.c.h.b16 %v566
        %v649 = vunpack.c.l.b16 %v567
        %v650 = vunpack.c.h.b16 %v567
        %v651 = vunpack.c.l.b16 %v568
        %v652 = vunpack.c.h.b16 %v568
        %v653 = vunpack.c.l.b16 %v569
        %v654 = vunpack.c.h.b16 %v569
        %v655 = vunpack.c.l.b16 %v570
        %v656 = vunpack.c.h.b16 %v570
        %v657 = vunpack.c.l.b16 %v571
        %v658 = vunpack.c.h.b16 %v571
        %v659 = vunpack.c.l.b16 %v572
        %v660 = vunpack.c.h.b16 %v572
        %v661 = vunpack.c.l.b16 %v573
        %v662 = vunpack.c.h.b16 %v573
        %v663 = vunpack.c.l.b16 %v574
        %v664 = vunpack.c.h.b16 %v574
        %v665 = vunpack.c.l.b16 %v575
        %v666 = vunpack.c.h.b16 %v575
        %v667 = vunpack.c.l.b16 %v576
        %v668 = vunpack.c.h.b16 %v576
        %v669 = vunpack.c.l.b16 %v577
        %v670 = vunpack.c.h.b16 %v577
        %v671 = vunpack.c.l.b16 %v578
        %v672 = vunpack.c.h.b16 %v578
        %v673 = vunpack.c.l.b16 %v579
        %v674 = vunpack.c.h.b16 %v579
        %v675 = vunpack.c.l.b16 %v580
        %v676 = vunpack.c.h.b16 %v580
        %v677 = vunpack.c.l.b16 %v581
        %v678 = vunpack.c.h.b16 %v581
        %v679 = vunpack.c.l.b16 %v582
        %v680 = vunpack.c.h.b16 %v582
        %v681 = vunpack.c.l.b16 %v583
        %v682 = vunpack.c.h.b16 %v583
        %v683 = vunpack.c.l.b16 %v584
        %v684 = vunpack.c.h.b16 %v584
        %v685 = vunpack.c.l.b16 %v585
        %v686 = vunpack.c.h.b16 %v585
        %v687 = vunpack.c.l.b16 %v586
        %v688 = vunpack.c.h.b16 %v586
        %v689 = vpack.c.b16 %v627, %v625
        %v690 = vpack.c.b16 %v628, %v626
        %v691 = vpack.c.b16 %v631, %v629
        %v692 = vpack.c.b16 %v632, %v630
        %v693 = vpack.c.b16 %v635, %v633
        %v694 = vpack.c.b16 %v636, %v634
        %v695 = vpack.c.b16 %v639, %v637
        %v696 = vpack.c.b16 %v640, %v638
        %v697 = vpack.c.b16 %v643, %v641
        %v698 = vpack.c.b16 %v644, %v642
        %v699 = vpack.c.b16 %v647, %v645
        %v700 = vpack.c.b16 %v648, %v646
        %v701 = vpack.c.b16 %v651, %v649
        %v702 = vpack.c.b16 %v652, %v650
        %v703 = vpack.c.b16 %v655, %v653
        %v704 = vpack.c.b16 %v656, %v654
        %v705 = vpack.c.b16 %v659, %v657
        %v706 = vpack.c.b16 %v660, %v658
        %v707 = vpack.c.b16 %v663, %v661
        %v708 = vpack.c.b16 %v664, %v662
        %v709 = vpack.c.b16 %v667, %v665
        %v710 = vpack.c.b16 %v668, %v666
        %v711 = vpack.c.b16 %v671, %v669
        %v712 = vpack.c.b16 %v672, %v670
        %v713 = vpack.c.b16 %v675, %v673
        %v714 = vpack.c.b16 %v676, %v674
        %v715 = vpack.c.b16 %v679, %v677
        %v716 = vpack.c.b16 %v680, %v678
        %v717 = vpack.c.b16 %v683, %v681
        %v718 = vpack.c.b16 %v684, %v682
        %v719 = vpack.c.b16 %v687, %v685
        %v720 = vpack.c.b16 %v688, %v686
        %753 = vmatpush.bf16.msra.mxu0 %v703
        %754 = vmatpush.bf16.msra.mxu0 %v701
        %755 = vmatpush.bf16.msra.mxu0 %v699
        %756 = vmatpush.bf16.msra.mxu0 %v697
        %757 = vmatpush.bf16.msra.mxu0 %v695
        %758 = vmatpush.bf16.msra.mxu0 %v693
        %759 = vmatpush.bf16.msra.mxu0 %v691
        %760 = vmatpush.bf16.msra.mxu0 %v689
        %761 = vmatmul.bf16.gmra.mxu0 %v553
        %v762 = vpop.f32.mrf.mxu0
        %v763 = vadd.f32 %v589, %v762
        %v764 = vpop.f32.mrf.mxu0
        %v765 = vadd.f32 %v589, %v764
        %766 = vdwg.mxu0
        %767 = vmatpush.bf16.msra.mxu0 %v719
        %768 = vmatpush.bf16.msra.mxu0 %v717
        %769 = vmatpush.bf16.msra.mxu0 %v715
        %770 = vmatpush.bf16.msra.mxu0 %v713
        %771 = vmatpush.bf16.msra.mxu0 %v711
        %772 = vmatpush.bf16.msra.mxu0 %v709
        %773 = vmatpush.bf16.msra.mxu0 %v707
        %774 = vmatpush.bf16.msra.mxu0 %v705
        %775 = vmatmul.bf16.gmra.mxu0 %v554
        %v776 = vpop.f32.mrf.mxu0
        %v777 = vadd.f32 %v763, %v776
        %v778 = vpop.f32.mrf.mxu0
        %v779 = vadd.f32 %v765, %v778
        %780 = vdwg.mxu0
        %781 = vmatpush.bf16.msra.mxu0 %v704
        %782 = vmatpush.bf16.msra.mxu0 %v702
        %783 = vmatpush.bf16.msra.mxu0 %v700
        %784 = vmatpush.bf16.msra.mxu0 %v698
        %785 = vmatpush.bf16.msra.mxu0 %v696
        %786 = vmatpush.bf16.msra.mxu0 %v694
        %787 = vmatpush.bf16.msra.mxu0 %v692
        %788 = vmatpush.bf16.msra.mxu0 %v690
        %789 = vmatmul.bf16.gmra.mxu0 %v553
        %v790 = vpop.f32.mrf.mxu0
        %v791 = vadd.f32 %v590, %v790
        %v792 = vpop.f32.mrf.mxu0
        %v793 = vadd.f32 %v590, %v792
        %794 = vdwg.mxu0
        %795 = vmatpush.bf16.msra.mxu0 %v720
        %796 = vmatpush.bf16.msra.mxu0 %v718
        %797 = vmatpush.bf16.msra.mxu0 %v716
        %798 = vmatpush.bf16.msra.mxu0 %v714
        %799 = vmatpush.bf16.msra.mxu0 %v712
        %800 = vmatpush.bf16.msra.mxu0 %v710
        %801 = vmatpush.bf16.msra.mxu0 %v708
        %802 = vmatpush.bf16.msra.mxu0 %v706
        %803 = vmatmul.bf16.gmra.mxu0 %v554
        %v804 = vpop.f32.mrf.mxu0
        %v805 = vadd.f32 %v791, %v804
        %v806 = vpop.f32.mrf.mxu0
        %v807 = vadd.f32 %v793, %v806
        %808 = vdwg.mxu0
        %vm809 = vcmp.ge.f32.partialorder %v777, 0.0
        %vm810 = vcmp.ge.f32.partialorder %v805, 0.0
        %vm811 = vcmp.ge.f32.partialorder %v779, 0.0
        %vm812 = vcmp.ge.f32.partialorder %v807, 0.0
        %v813 = vmul.f32 %v777, 0.01
        %v814 = vmul.f32 %v805, 0.01
        %v815 = vmul.f32 %v779, 0.01
        %v816 = vmul.f32 %v807, 0.01
        %v817 = vsel %vm809, %v777, %v813
        %v818 = vsel %vm810, %v805, %v814
        %v819 = vsel %vm811, %v779, %v815
        %v820 = vsel %vm812, %v807, %v816
        %v821 = vpack.c.bf16 %v819, %v817
        %v822 = vpack.c.bf16 %v820, %v818
        %v823 = vld [vmem:[#allocation6] sm:$0xff]
        %v824 = vld [vmem:[#allocation6 + $0x8] sm:$0xff]
        %v825 = vld [vmem:[#allocation6 + $0x10] sm:$0xff]
        %v826 = vld [vmem:[#allocation6 + $0x18] sm:$0xff]
        %v827 = vld [vmem:[#allocation6 + $0x20] sm:$0xff]
        %v828 = vld [vmem:[#allocation6 + $0x28] sm:$0xff]
        %v829 = vld [vmem:[#allocation6 + $0x30] sm:$0xff]
        %v830 = vld [vmem:[#allocation6 + $0x38] sm:$0xff]
        %v831 = vld [vmem:[#allocation6 + $0x40] sm:$0xff]
        %v832 = vld [vmem:[#allocation6 + $0x48] sm:$0xff]
        %v833 = vld [vmem:[#allocation6 + $0x50] sm:$0xff]
        %v834 = vld [vmem:[#allocation6 + $0x58] sm:$0xff]
        %v835 = vld [vmem:[#allocation6 + $0x60] sm:$0xff]
        %v836 = vld [vmem:[#allocation6 + $0x68] sm:$0xff]
        %v837 = vld [vmem:[#allocation6 + $0x70] sm:$0xff]
        %v838 = vld [vmem:[#allocation6 + $0x78] sm:$0xff]
        %v839 = vld [vmem:[#allocation6 + $0x80] sm:$0xff]
        %v840 = vld [vmem:[#allocation6 + $0x88] sm:$0xff]
        %v841 = vld [vmem:[#allocation6 + $0x90] sm:$0xff]
        %v842 = vld [vmem:[#allocation6 + $0x98] sm:$0xff]
        %v843 = vld [vmem:[#allocation6 + $0xa0] sm:$0xff]
        %v844 = vld [vmem:[#allocation6 + $0xa8] sm:$0xff]
        %v845 = vld [vmem:[#allocation6 + $0xb0] sm:$0xff]
        %v846 = vld [vmem:[#allocation6 + $0xb8] sm:$0xff]
        %v847 = vld [vmem:[#allocation6 + $0xc0] sm:$0xff]
        %v848 = vld [vmem:[#allocation6 + $0xc8] sm:$0xff]
        %v849 = vld [vmem:[#allocation6 + $0xd0] sm:$0xff]
        %v850 = vld [vmem:[#allocation6 + $0xd8] sm:$0xff]
        %v851 = vld [vmem:[#allocation6 + $0xe0] sm:$0xff]
        %v852 = vld [vmem:[#allocation6 + $0xe8] sm:$0xff]
        %v853 = vld [vmem:[#allocation6 + $0xf0] sm:$0xff]
        %v854 = vld [vmem:[#allocation6 + $0xf8] sm:$0xff]
        %v855 = vld [vmem:[%s6] sm:$0x3]
        %v857 = vperm.slane %v855, 0
        %v858 = vperm.slane %v855, 1
        %v893 = vunpack.c.l.b16 %v823
        %v894 = vunpack.c.h.b16 %v823
        %v895 = vunpack.c.l.b16 %v824
        %v896 = vunpack.c.h.b16 %v824
        %v897 = vunpack.c.l.b16 %v825
        %v898 = vunpack.c.h.b16 %v825
        %v899 = vunpack.c.l.b16 %v826
        %v900 = vunpack.c.h.b16 %v826
        %v901 = vunpack.c.l.b16 %v827
        %v902 = vunpack.c.h.b16 %v827
        %v903 = vunpack.c.l.b16 %v828
        %v904 = vunpack.c.h.b16 %v828
        %v905 = vunpack.c.l.b16 %v829
        %v906 = vunpack.c.h.b16 %v829
        %v907 = vunpack.c.l.b16 %v830
        %v908 = vunpack.c.h.b16 %v830
        %v909 = vunpack.c.l.b16 %v831
        %v910 = vunpack.c.h.b16 %v831
        %v911 = vunpack.c.l.b16 %v832
        %v912 = vunpack.c.h.b16 %v832
        %v913 = vunpack.c.l.b16 %v833
        %v914 = vunpack.c.h.b16 %v833
        %v915 = vunpack.c.l.b16 %v834
        %v916 = vunpack.c.h.b16 %v834
        %v917 = vunpack.c.l.b16 %v835
        %v918 = vunpack.c.h.b16 %v835
        %v919 = vunpack.c.l.b16 %v836
        %v920 = vunpack.c.h.b16 %v836
        %v921 = vunpack.c.l.b16 %v837
        %v922 = vunpack.c.h.b16 %v837
        %v923 = vunpack.c.l.b16 %v838
        %v924 = vunpack.c.h.b16 %v838
        %v925 = vunpack.c.l.b16 %v839
        %v926 = vunpack.c.h.b16 %v839
        %v927 = vunpack.c.l.b16 %v840
        %v928 = vunpack.c.h.b16 %v840
        %v929 = vunpack.c.l.b16 %v841
        %v930 = vunpack.c.h.b16 %v841
        %v931 = vunpack.c.l.b16 %v842
        %v932 = vunpack.c.h.b16 %v842
        %v933 = vunpack.c.l.b16 %v843
        %v934 = vunpack.c.h.b16 %v843
        %v935 = vunpack.c.l.b16 %v844
        %v936 = vunpack.c.h.b16 %v844
        %v937 = vunpack.c.l.b16 %v845
        %v938 = vunpack.c.h.b16 %v845
        %v939 = vunpack.c.l.b16 %v846
        %v940 = vunpack.c.h.b16 %v846
        %v941 = vunpack.c.l.b16 %v847
        %v942 = vunpack.c.h.b16 %v847
        %v943 = vunpack.c.l.b16 %v848
        %v944 = vunpack.c.h.b16 %v848
        %v945 = vunpack.c.l.b16 %v849
        %v946 = vunpack.c.h.b16 %v849
        %v947 = vunpack.c.l.b16 %v850
        %v948 = vunpack.c.h.b16 %v850
        %v949 = vunpack.c.l.b16 %v851
        %v950 = vunpack.c.h.b16 %v851
        %v951 = vunpack.c.l.b16 %v852
        %v952 = vunpack.c.h.b16 %v852
        %v953 = vunpack.c.l.b16 %v853
        %v954 = vunpack.c.h.b16 %v853
        %v955 = vunpack.c.l.b16 %v854
        %v956 = vunpack.c.h.b16 %v854
        %v957 = vpack.c.b16 %v895, %v893
        %v958 = vpack.c.b16 %v896, %v894
        %v959 = vpack.c.b16 %v899, %v897
        %v960 = vpack.c.b16 %v900, %v898
        %v961 = vpack.c.b16 %v903, %v901
        %v962 = vpack.c.b16 %v904, %v902
        %v963 = vpack.c.b16 %v907, %v905
        %v964 = vpack.c.b16 %v908, %v906
        %v965 = vpack.c.b16 %v911, %v909
        %v966 = vpack.c.b16 %v912, %v910
        %v967 = vpack.c.b16 %v915, %v913
        %v968 = vpack.c.b16 %v916, %v914
        %v969 = vpack.c.b16 %v919, %v917
        %v970 = vpack.c.b16 %v920, %v918
        %v971 = vpack.c.b16 %v923, %v921
        %v972 = vpack.c.b16 %v924, %v922
        %v973 = vpack.c.b16 %v927, %v925
        %v974 = vpack.c.b16 %v928, %v926
        %v975 = vpack.c.b16 %v931, %v929
        %v976 = vpack.c.b16 %v932, %v930
        %v977 = vpack.c.b16 %v935, %v933
        %v978 = vpack.c.b16 %v936, %v934
        %v979 = vpack.c.b16 %v939, %v937
        %v980 = vpack.c.b16 %v940, %v938
        %v981 = vpack.c.b16 %v943, %v941
        %v982 = vpack.c.b16 %v944, %v942
        %v983 = vpack.c.b16 %v947, %v945
        %v984 = vpack.c.b16 %v948, %v946
        %v985 = vpack.c.b16 %v951, %v949
        %v986 = vpack.c.b16 %v952, %v950
        %v987 = vpack.c.b16 %v955, %v953
        %v988 = vpack.c.b16 %v956, %v954
        %1021 = vmatpush.bf16.msra.mxu0 %v971
        %1022 = vmatpush.bf16.msra.mxu0 %v969
        %1023 = vmatpush.bf16.msra.mxu0 %v967
        %1024 = vmatpush.bf16.msra.mxu0 %v965
        %1025 = vmatpush.bf16.msra.mxu0 %v963
        %1026 = vmatpush.bf16.msra.mxu0 %v961
        %1027 = vmatpush.bf16.msra.mxu0 %v959
        %1028 = vmatpush.bf16.msra.mxu0 %v957
        %1029 = vmatmul.bf16.gmra.mxu0 %v821
        %v1030 = vpop.f32.mrf.mxu0
        %v1031 = vadd.f32 %v857, %v1030
        %v1032 = vpop.f32.mrf.mxu0
        %v1033 = vadd.f32 %v857, %v1032
        %1034 = vdwg.mxu0
        %1035 = vmatpush.bf16.msra.mxu0 %v987
        %1036 = vmatpush.bf16.msra.mxu0 %v985
        %1037 = vmatpush.bf16.msra.mxu0 %v983
        %1038 = vmatpush.bf16.msra.mxu0 %v981
        %1039 = vmatpush.bf16.msra.mxu0 %v979
        %1040 = vmatpush.bf16.msra.mxu0 %v977
        %1041 = vmatpush.bf16.msra.mxu0 %v975
        %1042 = vmatpush.bf16.msra.mxu0 %v973
        %1043 = vmatmul.bf16.gmra.mxu0 %v822
        %v1044 = vpop.f32.mrf.mxu0
        %v1045 = vadd.f32 %v1031, %v1044
        %v1046 = vpop.f32.mrf.mxu0
        %v1047 = vadd.f32 %v1033, %v1046
        %1048 = vdwg.mxu0
        %1049 = vmatpush.bf16.msra.mxu0 %v972
        %1050 = vmatpush.bf16.msra.mxu0 %v970
        %1051 = vmatpush.bf16.msra.mxu0 %v968
        %1052 = vmatpush.bf16.msra.mxu0 %v966
        %1053 = vmatpush.bf16.msra.mxu0 %v964
        %1054 = vmatpush.bf16.msra.mxu0 %v962
        %1055 = vmatpush.bf16.msra.mxu0 %v960
        %1056 = vmatpush.bf16.msra.mxu0 %v958
        %1057 = vmatmul.bf16.gmra.mxu0 %v821
        %v1058 = vpop.f32.mrf.mxu0
        %v1059 = vadd.f32 %v858, %v1058
        %v1060 = vpop.f32.mrf.mxu0
        %v1061 = vadd.f32 %v858, %v1060
        %1062 = vdwg.mxu0
        %1063 = vmatpush.bf16.msra.mxu0 %v988
        %1064 = vmatpush.bf16.msra.mxu0 %v986
        %1065 = vmatpush.bf16.msra.mxu0 %v984
        %1066 = vmatpush.bf16.msra.mxu0 %v982
        %1067 = vmatpush.bf16.msra.mxu0 %v980
        %1068 = vmatpush.bf16.msra.mxu0 %v978
        %1069 = vmatpush.bf16.msra.mxu0 %v976
        %1070 = vmatpush.bf16.msra.mxu0 %v974
        %1071 = vmatmul.bf16.gmra.mxu0 %v822
        %v1072 = vpop.f32.mrf.mxu0
        %v1073 = vadd.f32 %v1059, %v1072
        %v1074 = vpop.f32.mrf.mxu0
        %v1075 = vadd.f32 %v1061, %v1074
        %1076 = vdwg.mxu0
        %v1077 = vadd.f32 %v1045, %v549
        %v1078 = vadd.f32 %v1073, %v550
        %v1079 = vadd.f32 %v1047, %v551
        %v1080 = vadd.f32 %v1075, %v552
        %vm1081 = vcmp.ge.f32.partialorder %v1077, 0.0
        %vm1082 = vcmp.ge.f32.partialorder %v1078, 0.0
        %vm1083 = vcmp.ge.f32.partialorder %v1079, 0.0
        %vm1084 = vcmp.ge.f32.partialorder %v1080, 0.0
        %v1085 = vmul.f32 %v1077, 0.01
        %v1086 = vmul.f32 %v1078, 0.01
        %v1087 = vmul.f32 %v1079, 0.01
        %v1088 = vmul.f32 %v1080, 0.01
        %v1089 = vsel %vm1081, %v1077, %v1085
        %v1090 = vsel %vm1082, %v1078, %v1086
        %v1091 = vsel %vm1083, %v1079, %v1087
        %v1092 = vsel %vm1084, %v1080, %v1088
        %v1093 = vpack.c.bf16 %v1091, %v1089
        %v1094 = vpack.c.bf16 %v1092, %v1090
        %v1095 = vld [vmem:[#allocation7] sm:$0xf]
        %v1096 = vld [vmem:[#allocation7 + $0x4] sm:$0xf]
        %v1097 = vld [vmem:[#allocation7 + $0x8] sm:$0xf]
        %v1098 = vld [vmem:[#allocation7 + $0xc] sm:$0xf]
        %v1099 = vld [vmem:[#allocation7 + $0x10] sm:$0xf]
        %v1100 = vld [vmem:[#allocation7 + $0x14] sm:$0xf]
        %v1101 = vld [vmem:[#allocation7 + $0x18] sm:$0xf]
        %v1102 = vld [vmem:[#allocation7 + $0x1c] sm:$0xf]
        %v1103 = vld [vmem:[#allocation7 + $0x20] sm:$0xf]
        %v1104 = vld [vmem:[#allocation7 + $0x24] sm:$0xf]
        %v1105 = vld [vmem:[#allocation7 + $0x28] sm:$0xf]
        %v1106 = vld [vmem:[#allocation7 + $0x2c] sm:$0xf]
        %v1107 = vld [vmem:[#allocation7 + $0x30] sm:$0xf]
        %v1108 = vld [vmem:[#allocation7 + $0x34] sm:$0xf]
        %v1109 = vld [vmem:[#allocation7 + $0x38] sm:$0xf]
        %v1110 = vld [vmem:[#allocation7 + $0x3c] sm:$0xf]
        %v1111 = vld [vmem:[#allocation7 + $0x40] sm:$0xf]
        %v1112 = vld [vmem:[#allocation7 + $0x44] sm:$0xf]
        %v1113 = vld [vmem:[#allocation7 + $0x48] sm:$0xf]
        %v1114 = vld [vmem:[#allocation7 + $0x4c] sm:$0xf]
        %v1115 = vld [vmem:[#allocation7 + $0x50] sm:$0xf]
        %v1116 = vld [vmem:[#allocation7 + $0x54] sm:$0xf]
        %v1117 = vld [vmem:[#allocation7 + $0x58] sm:$0xf]
        %v1118 = vld [vmem:[#allocation7 + $0x5c] sm:$0xf]
        %v1119 = vld [vmem:[#allocation7 + $0x60] sm:$0xf]
        %v1120 = vld [vmem:[#allocation7 + $0x64] sm:$0xf]
        %v1121 = vld [vmem:[#allocation7 + $0x68] sm:$0xf]
        %v1122 = vld [vmem:[#allocation7 + $0x6c] sm:$0xf]
        %v1123 = vld [vmem:[#allocation7 + $0x70] sm:$0xf]
        %v1124 = vld [vmem:[#allocation7 + $0x74] sm:$0xf]
        %v1125 = vld [vmem:[#allocation7 + $0x78] sm:$0xf]
        %v1126 = vld [vmem:[#allocation7 + $0x7c] sm:$0xf]
        %v1127 = vld [vmem:[%s8] sm:$0x1]
        %v1129 = vperm.slane %v1127, 0
        %v1163 = vunpack.c.l.b16 %v1095
        %v1164 = vunpack.c.l.b16 %v1096
        %v1165 = vunpack.c.l.b16 %v1097
        %v1166 = vunpack.c.l.b16 %v1098
        %v1167 = vunpack.c.l.b16 %v1099
        %v1168 = vunpack.c.l.b16 %v1100
        %v1169 = vunpack.c.l.b16 %v1101
        %v1170 = vunpack.c.l.b16 %v1102
        %v1171 = vunpack.c.l.b16 %v1103
        %v1172 = vunpack.c.l.b16 %v1104
        %v1173 = vunpack.c.l.b16 %v1105
        %v1174 = vunpack.c.l.b16 %v1106
        %v1175 = vunpack.c.l.b16 %v1107
        %v1176 = vunpack.c.l.b16 %v1108
        %v1177 = vunpack.c.l.b16 %v1109
        %v1178 = vunpack.c.l.b16 %v1110
        %v1179 = vunpack.c.l.b16 %v1111
        %v1180 = vunpack.c.l.b16 %v1112
        %v1181 = vunpack.c.l.b16 %v1113
        %v1182 = vunpack.c.l.b16 %v1114
        %v1183 = vunpack.c.l.b16 %v1115
        %v1184 = vunpack.c.l.b16 %v1116
        %v1185 = vunpack.c.l.b16 %v1117
        %v1186 = vunpack.c.l.b16 %v1118
        %v1187 = vunpack.c.l.b16 %v1119
        %v1188 = vunpack.c.l.b16 %v1120
        %v1189 = vunpack.c.l.b16 %v1121
        %v1190 = vunpack.c.l.b16 %v1122
        %v1191 = vunpack.c.l.b16 %v1123
        %v1192 = vunpack.c.l.b16 %v1124
        %v1193 = vunpack.c.l.b16 %v1125
        %v1194 = vunpack.c.l.b16 %v1126
        %v1195 = vpack.c.b16 %v1164, %v1163
        %v1196 = vpack.c.b16 %v1166, %v1165
        %v1197 = vpack.c.b16 %v1168, %v1167
        %v1198 = vpack.c.b16 %v1170, %v1169
        %v1199 = vpack.c.b16 %v1172, %v1171
        %v1200 = vpack.c.b16 %v1174, %v1173
        %v1201 = vpack.c.b16 %v1176, %v1175
        %v1202 = vpack.c.b16 %v1178, %v1177
        %v1203 = vpack.c.b16 %v1180, %v1179
        %v1204 = vpack.c.b16 %v1182, %v1181
        %v1205 = vpack.c.b16 %v1184, %v1183
        %v1206 = vpack.c.b16 %v1186, %v1185
        %v1207 = vpack.c.b16 %v1188, %v1187
        %v1208 = vpack.c.b16 %v1190, %v1189
        %v1209 = vpack.c.b16 %v1192, %v1191
        %v1210 = vpack.c.b16 %v1194, %v1193
        %1227 = vmatpush.bf16.msra.mxu0 %v1202
        %1228 = vmatpush.bf16.msra.mxu0 %v1201
        %1229 = vmatpush.bf16.msra.mxu0 %v1200
        %1230 = vmatpush.bf16.msra.mxu0 %v1199
        %1231 = vmatpush.bf16.msra.mxu0 %v1198
        %1232 = vmatpush.bf16.msra.mxu0 %v1197
        %1233 = vmatpush.bf16.msra.mxu0 %v1196
        %1234 = vmatpush.bf16.msra.mxu0 %v1195
        %1235 = vmatmul.bf16.gmra.mxu0 %v1093
        %v1236 = vpop.f32.mrf.mxu0
        %v1237 = vadd.f32 %v1129, %v1236
        %v1238 = vpop.f32.mrf.mxu0
        %v1239 = vadd.f32 %v1129, %v1238
        %1240 = vdwg.mxu0
        %1241 = vmatpush.bf16.msra.mxu0 %v1210
        %1242 = vmatpush.bf16.msra.mxu0 %v1209
        %1243 = vmatpush.bf16.msra.mxu0 %v1208
        %1244 = vmatpush.bf16.msra.mxu0 %v1207
        %1245 = vmatpush.bf16.msra.mxu0 %v1206
        %1246 = vmatpush.bf16.msra.mxu0 %v1205
        %1247 = vmatpush.bf16.msra.mxu0 %v1204
        %1248 = vmatpush.bf16.msra.mxu0 %v1203
        %1249 = vmatmul.bf16.gmra.mxu0 %v1094
        %v1250 = vpop.f32.mrf.mxu0
        %v1251 = vadd.f32 %v1237, %v1250
        %v1252 = vpop.f32.mrf.mxu0
        %v1253 = vadd.f32 %v1239, %v1252
        %1254 = vdwg.mxu0
        %1255 = vst [vmem:[%s401] sm:$0xff] %v1251
        %1256 = vst [vmem:[%s401 + $0x8] sm:$0xff] %v1253
        %s1257 = smul.u32 2, %s23
        %p1258 = scmp.lt.s32.totalorder %s1257, 3
        %s1259 = scalar_select %p1258, %s1257, 3
        %s1260 = smul.addr %s1259, 8
        %s1261 = scalar_lea.vmem %s9, %s1260
        // Predicated region
        $region73: #{mlp_forward.1} parent=55 // pred_check
          %p1262 = pneg %p235
        $region74: #{mlp_forward.1} parent=55 // pred_check_branch
          %1264 = sbr.rel (%p1262) target = $region76
        $region75: #{mlp_forward.1} parent=55 // pred_region
          %s1265 = smul.u32 2, %s23
        $region76: #{mlp_forward.1} parent=55 // pred_fallthru
          _
      $region56: #{mlp_forward.1} parent=5 // pred_fallthru
        _
      %p1266 = scmp.le.s32.totalorder 2, %s18
      // Predicated region
      $region77: #{mlp_forward.1} parent=5 // pred_check
        %p1267 = pneg %p1266
      $region78: #{mlp_forward.1} parent=5 // pred_check_branch
        %1269 = sbr.rel (%p1267) target = $region80
      $region79: #{mlp_forward.1} parent=5 // pred_region
        %s1270 = ssub.s32 %s18, 2
        // Predicated region
        $region81: #{mlp_forward.1} parent=79 // pred_check
          %p1271 = pneg %p241
        $region82: #{mlp_forward.1} parent=79 // pred_check_branch
          %1273 = sbr.rel (%p1271) target = $region84
        $region83: #{mlp_forward.1} parent=79 // pred_region
          %s1274 = smul.u32 2, %s24
          %p1275 = scmp.lt.s32.totalorder %s1274, 3
          %s1276 = scalar_select %p1275, %s1274, 3
          %s1277 = smul.addr %s1276, 8
          %s1278 = scalar_lea.vmem %s9, %s1277
        $region84: #{mlp_forward.1} parent=79 // pred_fallthru
          _
      $region80: #{mlp_forward.1} parent=5 // pred_fallthru
        _
    $region6: #{mlp_forward.1} parent=1 // loop_footer
      %s22 = sadd.s32 1, %s18
    $region7: #{mlp_forward.1} parent=1 // loop_footer_branch
      %17 = sbr.rel target = $region3
    $region8: #{mlp_forward.1} parent=1 // loop_exit
      _
    %1279 = vsyncpa [#allocation3], 1
    %s1280 = scalar_lea.sflag [#allocation3], 1
    %1281 = vsyncpa %s1280, 1
    %1282 = vsyncpa [#allocation5], 1
    %1283 = vsyncpa [#allocation8], 1

// kernel: mlp_forward.1
$region0: #{mlp_forward.1}
  #allocation0 [shape = 'u32[]', space=smem, size = 0x4, offset = 0x4, fixed_abs, tag = 'smem constant byte address 0x4 - core index']
  #allocation1 [shape = 'u32[72,128]{1,0:T(1,128)}', space=vmem, size = 0x9000, scoped, tag = 'internal scratch']
  %s0 = inlined_call_operand.vmem [shape: bf16[32,128], index: 0, kind: input, shape index: {}]
  %s1 = inlined_call_operand.hbm [shape: bf16[128,256], index: 1, kind: input, shape index: {}]
  %s2 = inlined_call_operand.vmem [shape: f32[1,256], index: 2, kind: input, shape index: {}]
  %s3 = inlined_call_operand.hbm [shape: bf16[256,256], index: 3, kind: input, shape index: {}]
  %s4 = inlined_call_operand.vmem [shape: f32[1,256], index: 4, kind: input, shape index: {}]
  %s5 = inlined_call_operand.hbm [shape: bf16[256,256], index: 5, kind: input, shape index: {}]
  %s6 = inlined_call_operand.vmem [shape: f32[1,256], index: 6, kind: input, shape index: {}]
  %s7 = inlined_call_operand.hbm [shape: bf16[256,128], index: 7, kind: input, shape index: {}]
  %s8 = inlined_call_operand.vmem [shape: f32[1,128], index: 8, kind: input, shape index: {}]
  %s9 = inlined_call_operand.vmem [shape: f32[32,128], index: 9, kind: output, shape index: {}]
  %s10 = sld [smem:[#allocation0]]
  $region85: #{mlp_forward.1} parent=0
    _
  %s12 = ssub.s32 1, %s10
  %s13 = scalar_select 0, %s12, %s10
  $region1: #{mlp_forward.1} parent=0
    #allocation2 [shape = 'u8[65536]{0}', space=vmem, size = 0x10000, scoped, tag = 'input window, operand 1, single buffered']
    #allocation3 [shape = 's32[2]{0}', space=sflag, size = 0x8, scoped, tag = 'scoped memory for mlp_forward.1']
    #allocation4 [shape = 'u8[131072]{0}', space=vmem, size = 0x20000, scoped, tag = 'input window, operand 3, single buffered']
    #allocation5 [shape = 's32[1]{0}', space=sflag, size = 0x4, scoped, tag = 'scoped memory for mlp_forward.1']
    #allocation6 [shape = 'u8[131072]{0}', space=vmem, size = 0x20000, scoped, tag = 'input window, operand 5, single buffered']
    #allocation7 [shape = 'u8[65536]{0}', space=vmem, size = 0x10000, scoped, tag = 'input window, operand 7, single buffered']
    #allocation8 [shape = 's32[1]{0}', space=sflag, size = 0x4, scoped, tag = 'scoped memory for mlp_forward.1']
    %14 = vsyncpa [#allocation3], 0
    %15 = vsyncpa [#allocation5], 0
    %16 = vsyncpa [#allocation8], 0
    loop: start=0, step=1, limit=4
    $region2: #{mlp_forward.1} parent=1 // loop_pre_header
      _
    $region3: #{mlp_forward.1} parent=1 // loop_header
      %s18 = sphi 0, %s22
      %p19 = scmp.ge.s32.totalorder %s18, 4
      %s28 = sphi 0, %s30
      %s31 = sphi 0, %s28
      %s32 = sphi 0, %s31
      %s48 = sphi 0, %s32
      %s52 = sphi 0, %s52
      %s54 = sphi 0, %s52
      %s55 = sphi 0, %s54
      %s69 = sphi 0, %s55
      %s73 = sphi 0, %s73
      %s75 = sphi 0, %s73
      %s76 = sphi 0, %s75
      %s90 = sphi 0, %s76
      %s94 = sphi 0, %s94
      %s96 = sphi 0, %s94
      %s97 = sphi 0, %s96
      %s111 = sphi 0, %s97
      %s115 = sphi 0, %s115
      %s117 = sphi 0, %s115
      %s118 = sphi 0, %s117
      %s132 = sphi 0, %s118
      %s136 = sphi 0, %s136
      %s138 = sphi 0, %s136
      %s139 = sphi 0, %s138
      %s153 = sphi 0, %s139
      %s157 = sphi 0, %s157
      %s159 = sphi 0, %s157
      %s160 = sphi 0, %s159
      %s174 = sphi 0, %s160
      %s178 = sphi 0, %s178
      %s180 = sphi 0, %s178
      %s181 = sphi 0, %s180
      %s195 = sphi 0, %s181
      %s199 = sphi 0, %s199
      %s201 = sphi 0, %s199
      %s202 = sphi 0, %s201
      %s216 = sphi 0, %s202
      %s222 = sphi 0, %s224
      %s225 = sphi 0, %s222
      %s226 = sphi 0, %s225
      %s242 = sphi 0, %s226
    $region4: #{mlp_forward.1} parent=1 // loop_header_branch
      %21 = sbr.rel (%p19) target = $region8
    $region5: #{mlp_forward.1} parent=1 // loop_body
      %s23 = ssub.s32 %s18, 1
      %s24 = ssub.s32 %s18, 2
      %s25 = sadd.s32 %s18, 1
      %s26 = ssub.s32 %s18, %s25
      %p27 = scmp.eq.s32.totalorder %s26, 0
      %s29 = sadd.s32 %s28, 1
      %s30 = scalar_select %p27, %s28, %s29
      %p33 = pneg %p27
      %p34 = scmp.eq.s32.totalorder %s18, 1
      %p35 = por %p33, %p34
      %p36 = scmp.ne.s32.totalorder %s28, %s31
      %p37 = scmp.eq.s32.totalorder %s18, 0
      %p38 = por %p36, %p37
      %p39 = scmp.ne.s32.totalorder %s28, %s31
      %p40 = scmp.eq.s32.totalorder %s23, 1
      %p41 = por %p39, %p40
      %p42 = scmp.ne.s32.totalorder %s31, %s32
      %p43 = scmp.eq.s32.totalorder %s23, 0
      %p44 = por %p42, %p43
      %p45 = scmp.ne.s32.totalorder %s31, %s32
      %p46 = scmp.eq.s32.totalorder %s24, 1
      %p47 = por %p45, %p46
      %p49 = scmp.ne.s32.totalorder %s32, %s48
      %p50 = scmp.eq.s32.totalorder %s24, 0
      %p51 = por %p49, %p50
      %s53 = sadd.s32 %s52, 1
      %p56 = scmp.eq.s32.totalorder %s18, 1
      %p57 = scmp.ne.s32.totalorder %s52, %s54
      %p58 = scmp.eq.s32.totalorder %s18, 0
      %p59 = por %p57, %p58
      %p60 = scmp.ne.s32.totalorder %s52, %s54
      %p61 = scmp.eq.s32.totalorder %s23, 1
      %p62 = por %p60, %p61
      %p63 = scmp.ne.s32.totalorder %s54, %s55
      %p64 = scmp.eq.s32.totalorder %s23, 0
      %p65 = por %p63, %p64
      %p66 = scmp.ne.s32.totalorder %s54, %s55
      %p67 = scmp.eq.s32.totalorder %s24, 1
      %p68 = por %p66, %p67
      %p70 = scmp.ne.s32.totalorder %s55, %s69
      %p71 = scmp.eq.s32.totalorder %s24, 0
      %p72 = por %p70, %p71
      %s74 = sadd.s32 %s73, 1
      %p77 = scmp.eq.s32.totalorder %s18, 1
      %p78 = scmp.ne.s32.totalorder %s73, %s75
      %p79 = scmp.eq.s32.totalorder %s18, 0
      %p80 = por %p78, %p79
      %p81 = scmp.ne.s32.totalorder %s73, %s75
      %p82 = scmp.eq.s32.totalorder %s23, 1
      %p83 = por %p81, %p82
      %p84 = scmp.ne.s32.totalorder %s75, %s76
      %p85 = scmp.eq.s32.totalorder %s23, 0
      %p86 = por %p84, %p85
      %p87 = scmp.ne.s32.totalorder %s75, %s76
      %p88 = scmp.eq.s32.totalorder %s24, 1
      %p89 = por %p87, %p88
      %p91 = scmp.ne.s32.totalorder %s76, %s90
      %p92 = scmp.eq.s32.totalorder %s24, 0
      %p93 = por %p91, %p92
      %s95 = sadd.s32 %s94, 1
      %p98 = scmp.eq.s32.totalorder %s18, 1
      %p99 = scmp.ne.s32.totalorder %s94, %s96
      %p100 = scmp.eq.s32.totalorder %s18, 0
      %p101 = por %p99, %p100
      %p102 = scmp.ne.s32.totalorder %s94, %s96
      %p103 = scmp.eq.s32.totalorder %s23, 1
      %p104 = por %p102, %p103
      %p105 = scmp.ne.s32.totalorder %s96, %s97
      %p106 = scmp.eq.s32.totalorder %s23, 0
      %p107 = por %p105, %p106
      %p108 = scmp.ne.s32.totalorder %s96, %s97
      %p109 = scmp.eq.s32.totalorder %s24, 1
      %p110 = por %p108, %p109
      %p112 = scmp.ne.s32.totalorder %s97, %s111
      %p113 = scmp.eq.s32.totalorder %s24, 0
      %p114 = por %p112, %p113
      %s116 = sadd.s32 %s115, 1
      %p119 = scmp.eq.s32.totalorder %s18, 1
      %p120 = scmp.ne.s32.totalorder %s115, %s117
      %p121 = scmp.eq.s32.totalorder %s18, 0
      %p122 = por %p120, %p121
      %p123 = scmp.ne.s32.totalorder %s115, %s117
      %p124 = scmp.eq.s32.totalorder %s23, 1
      %p125 = por %p123, %p124
      %p126 = scmp.ne.s32.totalorder %s117, %s118
      %p127 = scmp.eq.s32.totalorder %s23, 0
      %p128 = por %p126, %p127
      %p129 = scmp.ne.s32.totalorder %s117, %s118
      %p130 = scmp.eq.s32.totalorder %s24, 1
      %p131 = por %p129, %p130
      %p133 = scmp.ne.s32.totalorder %s118, %s132
      %p134 = scmp.eq.s32.totalorder %s24, 0
      %p135 = por %p133, %p134
      %s137 = sadd.s32 %s136, 1
      %p140 = scmp.eq.s32.totalorder %s18, 1
      %p141 = scmp.ne.s32.totalorder %s136, %s138
      %p142 = scmp.eq.s32.totalorder %s18, 0
      %p143 = por %p141, %p142
      %p144 = scmp.ne.s32.totalorder %s136, %s138
      %p145 = scmp.eq.s32.totalorder %s23, 1
      %p146 = por %p144, %p145
      %p147 = scmp.ne.s32.totalorder %s138, %s139
      %p148 = scmp.eq.s32.totalorder %s23, 0
      %p149 = por %p147, %p148
      %p150 = scmp.ne.s32.totalorder %s138, %s139
      %p151 = scmp.eq.s32.totalorder %s24, 1
      %p152 = por %p150, %p151
      %p154 = scmp.ne.s32.totalorder %s139, %s153
      %p155 = scmp.eq.s32.totalorder %s24, 0
      %p156 = por %p154, %p155
      %s158 = sadd.s32 %s157, 1
      %p161 = scmp.eq.s32.totalorder %s18, 1
      %p162 = scmp.ne.s32.totalorder %s157, %s159
      %p163 = scmp.eq.s32.totalorder %s18, 0
      %p164 = por %p162, %p163
      %p165 = scmp.ne.s32.totalorder %s157, %s159
      %p166 = scmp.eq.s32.totalorder %s23, 1
      %p167 = por %p165, %p166
      %p168 = scmp.ne.s32.totalorder %s159, %s160
      %p169 = scmp.eq.s32.totalorder %s23, 0
      %p170 = por %p168, %p169
      %p171 = scmp.ne.s32.totalorder %s159, %s160
      %p172 = scmp.eq.s32.totalorder %s24, 1
      %p173 = por %p171, %p172
      %p175 = scmp.ne.s32.totalorder %s160, %s174
      %p176 = scmp.eq.s32.totalorder %s24, 0
      %p177 = por %p175, %p176
      %s179 = sadd.s32 %s178, 1
      %p182 = scmp.eq.s32.totalorder %s18, 1
      %p183 = scmp.ne.s32.totalorder %s178, %s180
      %p184 = scmp.eq.s32.totalorder %s18, 0
      %p185 = por %p183, %p184
      %p186 = scmp.ne.s32.totalorder %s178, %s180
      %p187 = scmp.eq.s32.totalorder %s23, 1
      %p188 = por %p186, %p187
      %p189 = scmp.ne.s32.totalorder %s180, %s181
      %p190 = scmp.eq.s32.totalorder %s23, 0
      %p191 = por %p189, %p190
      %p192 = scmp.ne.s32.totalorder %s180, %s181
      %p193 = scmp.eq.s32.totalorder %s24, 1
      %p194 = por %p192, %p193
      %p196 = scmp.ne.s32.totalorder %s181, %s195
      %p197 = scmp.eq.s32.totalorder %s24, 0
      %p198 = por %p196, %p197
      %s200 = sadd.s32 %s199, 1
      %p203 = scmp.eq.s32.totalorder %s18, 1
      %p204 = scmp.ne.s32.totalorder %s199, %s201
      %p205 = scmp.eq.s32.totalorder %s18, 0
      %p206 = por %p204, %p205
      %p207 = scmp.ne.s32.totalorder %s199, %s201
      %p208 = scmp.eq.s32.totalorder %s23, 1
      %p209 = por %p207, %p208
      %p210 = scmp.ne.s32.totalorder %s201, %s202
      %p211 = scmp.eq.s32.totalorder %s23, 0
      %p212 = por %p210, %p211
      %p213 = scmp.ne.s32.totalorder %s201, %s202
      %p214 = scmp.eq.s32.totalorder %s24, 1
      %p215 = por %p213, %p214
      %p217 = scmp.ne.s32.totalorder %s202, %s216
      %p218 = scmp.eq.s32.totalorder %s24, 0
      %p219 = por %p217, %p218
      %s220 = ssub.s32 %s18, %s25
      %p221 = scmp.eq.s32.totalorder %s220, 0
      %s223 = sadd.s32 %s222, 1
      %s224 = scalar_select %p221, %s222, %s223
      %p227 = pneg %p221
      %p228 = scmp.eq.s32.totalorder %s18, 1
      %p229 = por %p227, %p228
      %p230 = scmp.ne.s32.totalorder %s222, %s225
      %p231 = scmp.eq.s32.totalorder %s18, 0
      %p232 = por %p230, %p231
      %p233 = scmp.ne.s32.totalorder %s222, %s225
      %p234 = scmp.eq.s32.totalorder %s23, 1
      %p235 = por %p233, %p234
      %p236 = scmp.ne.s32.totalorder %s225, %s226
      %p237 = scmp.eq.s32.totalorder %s23, 0
      %p238 = por %p236, %p237
      %p239 = scmp.ne.s32.totalorder %s225, %s226
      %p240 = scmp.eq.s32.totalorder %s24, 1
      %p241 = por %p239, %p240
      %p243 = scmp.ne.s32.totalorder %s226, %s242
      %p244 = scmp.eq.s32.totalorder %s24, 0
      %p245 = por %p243, %p244
      %p246 = scmp.le.s32.totalorder 1, %s18
      %p247 = scmp.lt.s32.totalorder %s18, 3
      %p248 = pnand %p246, %p247
      %p249 = pneg %p248
      // Predicated region
      $region9: #{mlp_forward.1} parent=5 // pred_check
        _
      $region10: #{mlp_forward.1} parent=5 // pred_check_branch
        %251 = sbr.rel (%p248) target = $region12
      $region11: #{mlp_forward.1} parent=5 // pred_region
        %s252 = ssub.s32 %s18, 1
        // Predicated region
        $region13: #{mlp_forward.1} parent=11 // pred_check
          %p253 = pneg %p65
        $region14: #{mlp_forward.1} parent=11 // pred_check_branch
          %255 = sbr.rel (%p253) target = $region16
        $region15: #{mlp_forward.1} parent=11 // pred_region
          %257 = vsyncadd [#allocation3], 0
          %s258 = sshll.u32 %s1, 4
          %s259 = int_to_ptr.hbm [resolvable:$true] %s258
          %s260 = sshll.u32 [#allocation2], 4
          %s261 = int_to_ptr.vmem [resolvable:$true] %s260
          %266 = dma.hbm_to_vmem [thread:$0]  %s259, 2048, %s261, [#allocation3], 128, 128, 8
        $region16: #{mlp_forward.1} parent=11 // pred_fallthru
          _
        // Predicated region
        $region17: #{mlp_forward.1} parent=11 // pred_check
          %p267 = pneg %p86
        $region18: #{mlp_forward.1} parent=11 // pred_check_branch
          %269 = sbr.rel (%p267) target = $region20
        $region19: #{mlp_forward.1} parent=11 // pred_region
          _
        $region20: #{mlp_forward.1} parent=11 // pred_fallthru
          _
        // Predicated region
        $region21: #{mlp_forward.1} parent=11 // pred_check
          %p270 = pneg %p107
        $region22: #{mlp_forward.1} parent=11 // pred_check_branch
          %272 = sbr.rel (%p270) target = $region24
        $region23: #{mlp_forward.1} parent=11 // pred_region
          %274 = vsyncadd [#allocation5], 0
          %s275 = sshll.u32 %s3, 4
          %s276 = int_to_ptr.hbm [resolvable:$true] %s275
          %s277 = sshll.u32 [#allocation4], 4
          %s278 = int_to_ptr.vmem [resolvable:$true] %s277
          %283 = dma.hbm_to_vmem [thread:$0]  %s276, 4096, %s278, [#allocation5], 128, 128, 8
        $region24: #{mlp_forward.1} parent=11 // pred_fallthru
          _
        // Predicated region
        $region25: #{mlp_forward.1} parent=11 // pred_check
          %p284 = pneg %p128
        $region26: #{mlp_forward.1} parent=11 // pred_check_branch
          %286 = sbr.rel (%p284) target = $region28
        $region27: #{mlp_forward.1} parent=11 // pred_region
          _
        $region28: #{mlp_forward.1} parent=11 // pred_fallthru
          _
        // Predicated region
        $region29: #{mlp_forward.1} parent=11 // pred_check
          %p287 = pneg %p149
        $region30: #{mlp_forward.1} parent=11 // pred_check_branch
          %289 = sbr.rel (%p287) target = $region32
        $region31: #{mlp_forward.1} parent=11 // pred_region
          %291 = vsyncadd [#allocation5], 0
          %s292 = sshll.u32 %s5, 4
          %s293 = int_to_ptr.hbm [resolvable:$true] %s292
          %s294 = sshll.u32 [#allocation6], 4
          %s295 = int_to_ptr.vmem [resolvable:$true] %s294
          %300 = dma.hbm_to_vmem [thread:$0]  %s293, 4096, %s295, [#allocation5], 128, 128, 8
        $region32: #{mlp_forward.1} parent=11 // pred_fallthru
          _
        // Predicated region
        $region33: #{mlp_forward.1} parent=11 // pred_check
          %p301 = pneg %p170
        $region34: #{mlp_forward.1} parent=11 // pred_check_branch
          %303 = sbr.rel (%p301) target = $region36
        $region35: #{mlp_forward.1} parent=11 // pred_region
          _
        $region36: #{mlp_forward.1} parent=11 // pred_fallthru
          _
        // Predicated region
        $region37: #{mlp_forward.1} parent=11 // pred_check
          %p304 = pneg %p191
        $region38: #{mlp_forward.1} parent=11 // pred_check_branch
          %306 = sbr.rel (%p304) target = $region40
        $region39: #{mlp_forward.1} parent=11 // pred_region
          %308 = vsyncadd [#allocation8], 0
          %s309 = sshll.u32 %s7, 4
          %s310 = int_to_ptr.hbm [resolvable:$true] %s309
          %s311 = sshll.u32 [#allocation7], 4
          %s312 = int_to_ptr.vmem [resolvable:$true] %s311
          %317 = dma.hbm_to_vmem [thread:$0]  %s310, 2048, %s312, [#allocation8], 64, 64, 4
        $region40: #{mlp_forward.1} parent=11 // pred_fallthru
          _
        // Predicated region
        $region41: #{mlp_forward.1} parent=11 // pred_check
          %p318 = pneg %p212
        $region42: #{mlp_forward.1} parent=11 // pred_check_branch
          %320 = sbr.rel (%p318) target = $region44
        $region43: #{mlp_forward.1} parent=11 // pred_region
          _
        $region44: #{mlp_forward.1} parent=11 // pred_fallthru
          _
      $region12: #{mlp_forward.1} parent=5 // pred_fallthru
        _
      %p321 = scmp.lt.s32.totalorder %s18, 2
      // Predicated region
      $region45: #{mlp_forward.1} parent=5 // pred_check
        %p322 = pneg %p321
      $region46: #{mlp_forward.1} parent=5 // pred_check_branch
        %324 = sbr.rel (%p322) target = $region48
      $region47: #{mlp_forward.1} parent=5 // pred_region
        // Predicated region
        $region49: #{mlp_forward.1} parent=47 // pred_check
          %p325 = pneg %p38
        $region50: #{mlp_forward.1} parent=47 // pred_check_branch
          %327 = sbr.rel (%p325) target = $region52
        $region51: #{mlp_forward.1} parent=47 // pred_region
          %s328 = smul.u32 2, %s18
          %p329 = scmp.lt.s32.totalorder %s328, 3
          %s330 = scalar_select %p329, %s328, 3
          %s331 = smul.addr %s330, 4
          %s332 = scalar_lea.vmem %s0, %s331
          %s333 = smul.u32 2, %s18
        $region52: #{mlp_forward.1} parent=47 // pred_fallthru
          _
      $region48: #{mlp_forward.1} parent=5 // pred_fallthru
        _
      %p334 = scmp.le.s32.totalorder 1, %s18
      %p335 = scmp.lt.s32.totalorder %s18, 3
      %p336 = pnand %p334, %p335
      %p337 = pneg %p336
      // Predicated region
      $region53: #{mlp_forward.1} parent=5 // pred_check
        _
      $region54: #{mlp_forward.1} parent=5 // pred_check_branch
        %339 = sbr.rel (%p336) target = $region56
      $region55: #{mlp_forward.1} parent=5 // pred_region
        %s340 = ssub.s32 %s18, 1
        // Predicated region
        $region57: #{mlp_forward.1} parent=55 // pred_check
          %p341 = pneg %p65
        $region58: #{mlp_forward.1} parent=55 // pred_check_branch
          %343 = sbr.rel (%p341) target = $region60
        $region59: #{mlp_forward.1} parent=55 // pred_region
          %345 = dma.done [#allocation3], 2048
        $region60: #{mlp_forward.1} parent=55 // pred_fallthru
          _
        // Predicated region
        $region61: #{mlp_forward.1} parent=55 // pred_check
          %p346 = pneg %p107
        $region62: #{mlp_forward.1} parent=55 // pred_check_branch
          %348 = sbr.rel (%p346) target = $region64
        $region63: #{mlp_forward.1} parent=55 // pred_region
          %350 = dma.done [#allocation5], 4096
        $region64: #{mlp_forward.1} parent=55 // pred_fallthru
          _
        // Predicated region
        $region65: #{mlp_forward.1} parent=55 // pred_check
          %p351 = pneg %p149
        $region66: #{mlp_forward.1} parent=55 // pred_check_branch
          %353 = sbr.rel (%p351) target = $region68
        $region67: #{mlp_forward.1} parent=55 // pred_region
          %355 = dma.done [#allocation5], 4096
        $region68: #{mlp_forward.1} parent=55 // pred_fallthru
          _
        // Predicated region
        $region69: #{mlp_forward.1} parent=55 // pred_check
          %p356 = pneg %p191
        $region70: #{mlp_forward.1} parent=55 // pred_check_branch
          %358 = sbr.rel (%p356) target = $region72
        $region71: #{mlp_forward.1} parent=55 // pred_region
          %360 = dma.done [#allocation8], 2048
        $region72: #{mlp_forward.1} parent=55 // pred_fallthru
          _
        %s361 = smul.u32 2, %s23
        %p362 = scmp.lt.s32.totalorder %s361, 3
        %s363 = scalar_select %p362, %s361, 3
        %s364 = smul.addr %s363, 4
        %s365 = scalar_lea.vmem %s0, %s364
        %p366 = pneg %p44
        %p367 = pneg %p41
        %p368 = pneg %p65
        %p369 = pneg %p62
        %p370 = pneg %p86
        %p371 = pneg %p83
        %p372 = pneg %p107
        %p373 = pneg %p104
        %p374 = pneg %p128
        %p375 = pneg %p125
        %p376 = pneg %p149
        %p377 = pneg %p146
        %p378 = pneg %p170
        %p379 = pneg %p167
        %p380 = pneg %p191
        %p381 = pneg %p188
        %p382 = pneg %p212
        %p383 = pneg %p209
        %p384 = pneg %p238
        %p385 = pneg %p235
        %s386 = smul.u32 2, %s23
        %p387 = scmp.lt.s32.totalorder %s386, 3
        %s388 = scalar_select %p387, %s386, 3
        %s389 = smul.addr %s388, 8
        %s390 = scalar_lea.vmem %s9, %s389
        %s391 = smul.u32 2, %s23
        %p392 = scmp.lt.s32.totalorder %s391, 3
        %s393 = scalar_select %p392, %s391, 3
        %s394 = smul.addr %s393, 4
        %s395 = scalar_lea.vmem %s0, %s394
        %s396 = smul.u32 2, %s23
        %s397 = smul.u32 2, %s23
        %p398 = scmp.lt.s32.totalorder %s397, 3
        %s399 = scalar_select %p398, %s397, 3
        %s400 = smul.addr %s399, 8
        %s401 = scalar_lea.vmem %s9, %s400
        %s402 = smul.u32 2, %s23
        %v403 = vld [vmem:[%s395] sm:$0xf]
        %v404 = vld [vmem:[%s395 + $0x4] sm:$0xf]
        %v405 = vld [vmem:[#allocation2] sm:$0xff]
        %v406 = vld [vmem:[#allocation2 + $0x8] sm:$0xff]
        %v407 = vld [vmem:[#allocation2 + $0x10] sm:$0xff]
        %v408 = vld [vmem:[#allocation2 + $0x18] sm:$0xff]
        %v409 = vld [vmem:[#allocation2 + $0x20] sm:$0xff]
        %v410 = vld [vmem:[#allocation2 + $0x28] sm:$0xff]
        %v411 = vld [vmem:[#allocation2 + $0x30] sm:$0xff]
        %v412 = vld [vmem:[#allocation2 + $0x38] sm:$0xff]
        %v413 = vld [vmem:[#allocation2 + $0x40] sm:$0xff]
        %v414 = vld [vmem:[#allocation2 + $0x48] sm:$0xff]
        %v415 = vld [vmem:[#allocation2 + $0x50] sm:$0xff]
        %v416 = vld [vmem:[#allocation2 + $0x58] sm:$0xff]
        %v417 = vld [vmem:[#allocation2 + $0x60] sm:$0xff]
        %v418 = vld [vmem:[#allocation2 + $0x68] sm:$0xff]
        %v419 = vld [vmem:[#allocation2 + $0x70] sm:$0xff]
        %v420 = vld [vmem:[#allocation2 + $0x78] sm:$0xff]
        %v421 = vld [vmem:[%s2] sm:$0x3]
        %v423 = vperm.slane %v421, 0
        %v424 = vperm.slane %v421, 1
        %v429 = vunpack.c.l.b16 %v403
        %v430 = vunpack.c.l.b16 %v404
        %v431 = vpack.c.b16 %v430, %v429
        %v449 = vunpack.c.l.b16 %v405
        %v450 = vunpack.c.h.b16 %v405
        %v451 = vunpack.c.l.b16 %v406
        %v452 = vunpack.c.h.b16 %v406
        %v453 = vunpack.c.l.b16 %v407
        %v454 = vunpack.c.h.b16 %v407
        %v455 = vunpack.c.l.b16 %v408
        %v456 = vunpack.c.h.b16 %v408
        %v457 = vunpack.c.l.b16 %v409
        %v458 = vunpack.c.h.b16 %v409
        %v459 = vunpack.c.l.b16 %v410
        %v460 = vunpack.c.h.b16 %v410
        %v461 = vunpack.c.l.b16 %v411
        %v462 = vunpack.c.h.b16 %v411
        %v463 = vunpack.c.l.b16 %v412
        %v464 = vunpack.c.h.b16 %v412
        %v465 = vunpack.c.l.b16 %v413
        %v466 = vunpack.c.h.b16 %v413
        %v467 = vunpack.c.l.b16 %v414
        %v468 = vunpack.c.h.b16 %v414
        %v469 = vunpack.c.l.b16 %v415
        %v470 = vunpack.c.h.b16 %v415
        %v471 = vunpack.c.l.b16 %v416
        %v472 = vunpack.c.h.b16 %v416
        %v473 = vunpack.c.l.b16 %v417
        %v474 = vunpack.c.h.b16 %v417
        %v475 = vunpack.c.l.b16 %v418
        %v476 = vunpack.c.h.b16 %v418
        %v477 = vunpack.c.l.b16 %v419
        %v478 = vunpack.c.h.b16 %v419
        %v479 = vunpack.c.l.b16 %v420
        %v480 = vunpack.c.h.b16 %v420
        %v481 = vpack.c.b16 %v451, %v449
        %v482 = vpack.c.b16 %v452, %v450
        %v483 = vpack.c.b16 %v455, %v453
        %v484 = vpack.c.b16 %v456, %v454
        %v485 = vpack.c.b16 %v459, %v457
        %v486 = vpack.c.b16 %v460, %v458
        %v487 = vpack.c.b16 %v463, %v461
        %v488 = vpack.c.b16 %v464, %v462
        %v489 = vpack.c.b16 %v467, %v465
        %v490 = vpack.c.b16 %v468, %v466
        %v491 = vpack.c.b16 %v471, %v469
        %v492 = vpack.c.b16 %v472, %v470
        %v493 = vpack.c.b16 %v475, %v473
        %v494 = vpack.c.b16 %v476, %v474
        %v495 = vpack.c.b16 %v479, %v477
        %v496 = vpack.c.b16 %v480, %v478
        %513 = vmatpush.bf16.msra.mxu0 %v495
        %514 = vmatpush.bf16.msra.mxu0 %v493
        %515 = vmatpush.bf16.msra.mxu0 %v491
        %516 = vmatpush.bf16.msra.mxu0 %v489
        %517 = vmatpush.bf16.msra.mxu0 %v487
        %518 = vmatpush.bf16.msra.mxu0 %v485
        %519 = vmatpush.bf16.msra.mxu0 %v483
        %520 = vmatpush.bf16.msra.mxu0 %v481
        %521 = vmatmul.bf16.gmra.mxu0 %v431
        %v522 = vpop.f32.mrf.mxu0
        %v523 = vadd.f32 %v423, %v522
        %v524 = vpop.f32.mrf.mxu0
        %v525 = vadd.f32 %v423, %v524
        %526 = vdwg.mxu0
        %527 = vmatpush.bf16.msra.mxu0 %v496
        %528 = vmatpush.bf16.msra.mxu0 %v494
        %529 = vmatpush.bf16.msra.mxu0 %v492
        %530 = vmatpush.bf16.msra.mxu0 %v490
        %531 = vmatpush.bf16.msra.mxu0 %v488
        %532 = vmatpush.bf16.msra.mxu0 %v486
        %533 = vmatpush.bf16.msra.mxu0 %v484
        %534 = vmatpush.bf16.msra.mxu0 %v482
        %535 = vmatmul.bf16.gmra.mxu0 %v431
        %v536 = vpop.f32.mrf.mxu0
        %v537 = vadd.f32 %v424, %v536
        %v538 = vpop.f32.mrf.mxu0
        %v539 = vadd.f32 %v424, %v538
        %540 = vdwg.mxu0
        %vm541 = vcmp.ge.f32.partialorder %v523, 0.0
        %vm542 = vcmp.ge.f32.partialorder %v537, 0.0
        %vm543 = vcmp.ge.f32.partialorder %v525, 0.0
        %vm544 = vcmp.ge.f32.partialorder %v539, 0.0
        %v545 = vmul.f32 %v523, 0.01
        %v546 = vmul.f32 %v537, 0.01
        %v547 = vmul.f32 %v525, 0.01
        %v548 = vmul.f32 %v539, 0.01
        %v549 = vsel %vm541, %v523, %v545
        %v550 = vsel %vm542, %v537, %v546
        %v551 = vsel %vm543, %v525, %v547
        %v552 = vsel %vm544, %v539, %v548
        %v553 = vpack.c.bf16 %v551, %v549
        %v554 = vpack.c.bf16 %v552, %v550
        %v555 = vld [vmem:[#allocation4] sm:$0xff]
        %v556 = vld [vmem:[#allocation4 + $0x8] sm:$0xff]
        %v557 = vld [vmem:[#allocation4 + $0x10] sm:$0xff]
        %v558 = vld [vmem:[#allocation4 + $0x18] sm:$0xff]
        %v559 = vld [vmem:[#allocation4 + $0x20] sm:$0xff]
        %v560 = vld [vmem:[#allocation4 + $0x28] sm:$0xff]
        %v561 = vld [vmem:[#allocation4 + $0x30] sm:$0xff]
        %v562 = vld [vmem:[#allocation4 + $0x38] sm:$0xff]
        %v563 = vld [vmem:[#allocation4 + $0x40] sm:$0xff]
        %v564 = vld [vmem:[#allocation4 + $0x48] sm:$0xff]
        %v565 = vld [vmem:[#allocation4 + $0x50] sm:$0xff]
        %v566 = vld [vmem:[#allocation4 + $0x58] sm:$0xff]
        %v567 = vld [vmem:[#allocation4 + $0x60] sm:$0xff]
        %v568 = vld [vmem:[#allocation4 + $0x68] sm:$0xff]
        %v569 = vld [vmem:[#allocation4 + $0x70] sm:$0xff]
        %v570 = vld [vmem:[#allocation4 + $0x78] sm:$0xff]
        %v571 = vld [vmem:[#allocation4 + $0x80] sm:$0xff]
        %v572 = vld [vmem:[#allocation4 + $0x88] sm:$0xff]
        %v573 = vld [vmem:[#allocation4 + $0x90] sm:$0xff]
        %v574 = vld [vmem:[#allocation4 + $0x98] sm:$0xff]
        %v575 = vld [vmem:[#allocation4 + $0xa0] sm:$0xff]
        %v576 = vld [vmem:[#allocation4 + $0xa8] sm:$0xff]
        %v577 = vld [vmem:[#allocation4 + $0xb0] sm:$0xff]
        %v578 = vld [vmem:[#allocation4 + $0xb8] sm:$0xff]
        %v579 = vld [vmem:[#allocation4 + $0xc0] sm:$0xff]
        %v580 = vld [vmem:[#allocation4 + $0xc8] sm:$0xff]
        %v581 = vld [vmem:[#allocation4 + $0xd0] sm:$0xff]
        %v582 = vld [vmem:[#allocation4 + $0xd8] sm:$0xff]
        %v583 = vld [vmem:[#allocation4 + $0xe0] sm:$0xff]
        %v584 = vld [vmem:[#allocation4 + $0xe8] sm:$0xff]
        %v585 = vld [vmem:[#allocation4 + $0xf0] sm:$0xff]
        %v586 = vld [vmem:[#allocation4 + $0xf8] sm:$0xff]
        %v587 = vld [vmem:[%s4] sm:$0x3]
        %v589 = vperm.slane %v587, 0
        %v590 = vperm.slane %v587, 1
        %v625 = vunpack.c.l.b16 %v555
        %v626 = vunpack.c.h.b16 %v555
        %v627 = vunpack.c.l.b16 %v556
        %v628 = vunpack.c.h.b16 %v556
        %v629 = vunpack.c.l.b16 %v557
        %v630 = vunpack.c.h.b16 %v557
        %v631 = vunpack.c.l.b16 %v558
        %v632 = vunpack.c.h.b16 %v558
        %v633 = vunpack.c.l.b16 %v559
        %v634 = vunpack.c.h.b16 %v559
        %v635 = vunpack.c.l.b16 %v560
        %v636 = vunpack.c.h.b16 %v560
        %v637 = vunpack.c.l.b16 %v561
        %v638 = vunpack.c.h.b16 %v561
        %v639 = vunpack.c.l.b16 %v562
        %v640 = vunpack.c.h.b16 %v562
        %v641 = vunpack.c.l.b16 %v563
        %v642 = vunpack.c.h.b16 %v563
        %v643 = vunpack.c.l.b16 %v564
        %v644 = vunpack.c.h.b16 %v564
        %v645 = vunpack.c.l.b16 %v565
        %v646 = vunpack.c.h.b16 %v565
        %v647 = vunpack.c.l.b16 %v566
        %v648 = vunpack.c.h.b16 %v566
        %v649 = vunpack.c.l.b16 %v567
        %v650 = vunpack.c.h.b16 %v567
        %v651 = vunpack.c.l.b16 %v568
        %v652 = vunpack.c.h.b16 %v568
        %v653 = vunpack.c.l.b16 %v569
        %v654 = vunpack.c.h.b16 %v569
        %v655 = vunpack.c.l.b16 %v570
        %v656 = vunpack.c.h.b16 %v570
        %v657 = vunpack.c.l.b16 %v571
        %v658 = vunpack.c.h.b16 %v571
        %v659 = vunpack.c.l.b16 %v572
        %v660 = vunpack.c.h.b16 %v572
        %v661 = vunpack.c.l.b16 %v573
        %v662 = vunpack.c.h.b16 %v573
        %v663 = vunpack.c.l.b16 %v574
        %v664 = vunpack.c.h.b16 %v574
        %v665 = vunpack.c.l.b16 %v575
        %v666 = vunpack.c.h.b16 %v575
        %v667 = vunpack.c.l.b16 %v576
        %v668 = vunpack.c.h.b16 %v576
        %v669 = vunpack.c.l.b16 %v577
        %v670 = vunpack.c.h.b16 %v577
        %v671 = vunpack.c.l.b16 %v578
        %v672 = vunpack.c.h.b16 %v578
        %v673 = vunpack.c.l.b16 %v579
        %v674 = vunpack.c.h.b16 %v579
        %v675 = vunpack.c.l.b16 %v580
        %v676 = vunpack.c.h.b16 %v580
        %v677 = vunpack.c.l.b16 %v581
        %v678 = vunpack.c.h.b16 %v581
        %v679 = vunpack.c.l.b16 %v582
        %v680 = vunpack.c.h.b16 %v582
        %v681 = vunpack.c.l.b16 %v583
        %v682 = vunpack.c.h.b16 %v583
        %v683 = vunpack.c.l.b16 %v584
        %v684 = vunpack.c.h.b16 %v584
        %v685 = vunpack.c.l.b16 %v585
        %v686 = vunpack.c.h.b16 %v585
        %v687 = vunpack.c.l.b16 %v586
        %v688 = vunpack.c.h.b16 %v586
        %v689 = vpack.c.b16 %v627, %v625
        %v690 = vpack.c.b16 %v628, %v626
        %v691 = vpack.c.b16 %v631, %v629
        %v692 = vpack.c.b16 %v632, %v630
        %v693 = vpack.c.b16 %v635, %v633
        %v694 = vpack.c.b16 %v636, %v634
        %v695 = vpack.c.b16 %v639, %v637
        %v696 = vpack.c.b16 %v640, %v638
        %v697 = vpack.c.b16 %v643, %v641
        %v698 = vpack.c.b16 %v644, %v642
        %v699 = vpack.c.b16 %v647, %v645
        %v700 = vpack.c.b16 %v648, %v646
        %v701 = vpack.c.b16 %v651, %v649
        %v702 = vpack.c.b16 %v652, %v650
        %v703 = vpack.c.b16 %v655, %v653
        %v704 = vpack.c.b16 %v656, %v654
        %v705 = vpack.c.b16 %v659, %v657
        %v706 = vpack.c.b16 %v660, %v658
        %v707 = vpack.c.b16 %v663, %v661
        %v708 = vpack.c.b16 %v664, %v662
        %v709 = vpack.c.b16 %v667, %v665
        %v710 = vpack.c.b16 %v668, %v666
        %v711 = vpack.c.b16 %v671, %v669
        %v712 = vpack.c.b16 %v672, %v670
        %v713 = vpack.c.b16 %v675, %v673
        %v714 = vpack.c.b16 %v676, %v674
        %v715 = vpack.c.b16 %v679, %v677
        %v716 = vpack.c.b16 %v680, %v678
        %v717 = vpack.c.b16 %v683, %v681
        %v718 = vpack.c.b16 %v684, %v682
        %v719 = vpack.c.b16 %v687, %v685
        %v720 = vpack.c.b16 %v688, %v686
        %753 = vmatpush.bf16.msra.mxu0 %v703
        %754 = vmatpush.bf16.msra.mxu0 %v701
        %755 = vmatpush.bf16.msra.mxu0 %v699
        %756 = vmatpush.bf16.msra.mxu0 %v697
        %757 = vmatpush.bf16.msra.mxu0 %v695
        %758 = vmatpush.bf16.msra.mxu0 %v693
        %759 = vmatpush.bf16.msra.mxu0 %v691
        %760 = vmatpush.bf16.msra.mxu0 %v689
        %761 = vmatmul.bf16.gmra.mxu0 %v553
        %v762 = vpop.f32.mrf.mxu0
        %v763 = vadd.f32 %v589, %v762
        %v764 = vpop.f32.mrf.mxu0
        %v765 = vadd.f32 %v589, %v764
        %766 = vdwg.mxu0
        %767 = vmatpush.bf16.msra.mxu0 %v719
        %768 = vmatpush.bf16.msra.mxu0 %v717
        %769 = vmatpush.bf16.msra.mxu0 %v715
        %770 = vmatpush.bf16.msra.mxu0 %v713
        %771 = vmatpush.bf16.msra.mxu0 %v711
        %772 = vmatpush.bf16.msra.mxu0 %v709
        %773 = vmatpush.bf16.msra.mxu0 %v707
        %774 = vmatpush.bf16.msra.mxu0 %v705
        %775 = vmatmul.bf16.gmra.mxu0 %v554
        %v776 = vpop.f32.mrf.mxu0
        %v777 = vadd.f32 %v763, %v776
        %v778 = vpop.f32.mrf.mxu0
        %v779 = vadd.f32 %v765, %v778
        %780 = vdwg.mxu0
        %781 = vmatpush.bf16.msra.mxu0 %v704
        %782 = vmatpush.bf16.msra.mxu0 %v702
        %783 = vmatpush.bf16.msra.mxu0 %v700
        %784 = vmatpush.bf16.msra.mxu0 %v698
        %785 = vmatpush.bf16.msra.mxu0 %v696
        %786 = vmatpush.bf16.msra.mxu0 %v694
        %787 = vmatpush.bf16.msra.mxu0 %v692
        %788 = vmatpush.bf16.msra.mxu0 %v690
        %789 = vmatmul.bf16.gmra.mxu0 %v553
        %v790 = vpop.f32.mrf.mxu0
        %v791 = vadd.f32 %v590, %v790
        %v792 = vpop.f32.mrf.mxu0
        %v793 = vadd.f32 %v590, %v792
        %794 = vdwg.mxu0
        %795 = vmatpush.bf16.msra.mxu0 %v720
        %796 = vmatpush.bf16.msra.mxu0 %v718
        %797 = vmatpush.bf16.msra.mxu0 %v716
        %798 = vmatpush.bf16.msra.mxu0 %v714
        %799 = vmatpush.bf16.msra.mxu0 %v712
        %800 = vmatpush.bf16.msra.mxu0 %v710
        %801 = vmatpush.bf16.msra.mxu0 %v708
        %802 = vmatpush.bf16.msra.mxu0 %v706
        %803 = vmatmul.bf16.gmra.mxu0 %v554
        %v804 = vpop.f32.mrf.mxu0
        %v805 = vadd.f32 %v791, %v804
        %v806 = vpop.f32.mrf.mxu0
        %v807 = vadd.f32 %v793, %v806
        %808 = vdwg.mxu0
        %vm809 = vcmp.ge.f32.partialorder %v777, 0.0
        %vm810 = vcmp.ge.f32.partialorder %v805, 0.0
        %vm811 = vcmp.ge.f32.partialorder %v779, 0.0
        %vm812 = vcmp.ge.f32.partialorder %v807, 0.0
        %v813 = vmul.f32 %v777, 0.01
        %v814 = vmul.f32 %v805, 0.01
        %v815 = vmul.f32 %v779, 0.01
        %v816 = vmul.f32 %v807, 0.01
        %v817 = vsel %vm809, %v777, %v813
        %v818 = vsel %vm810, %v805, %v814
        %v819 = vsel %vm811, %v779, %v815
        %v820 = vsel %vm812, %v807, %v816
        %v821 = vpack.c.bf16 %v819, %v817
        %v822 = vpack.c.bf16 %v820, %v818
        %v823 = vld [vmem:[#allocation6] sm:$0xff]
        %v824 = vld [vmem:[#allocation6 + $0x8] sm:$0xff]
        %v825 = vld [vmem:[#allocation6 + $0x10] sm:$0xff]
        %v826 = vld [vmem:[#allocation6 + $0x18] sm:$0xff]
        %v827 = vld [vmem:[#allocation6 + $0x20] sm:$0xff]
        %v828 = vld [vmem:[#allocation6 + $0x28] sm:$0xff]
        %v829 = vld [vmem:[#allocation6 + $0x30] sm:$0xff]
        %v830 = vld [vmem:[#allocation6 + $0x38] sm:$0xff]
        %v831 = vld [vmem:[#allocation6 + $0x40] sm:$0xff]
        %v832 = vld [vmem:[#allocation6 + $0x48] sm:$0xff]
        %v833 = vld [vmem:[#allocation6 + $0x50] sm:$0xff]
        %v834 = vld [vmem:[#allocation6 + $0x58] sm:$0xff]
        %v835 = vld [vmem:[#allocation6 + $0x60] sm:$0xff]
        %v836 = vld [vmem:[#allocation6 + $0x68] sm:$0xff]
        %v837 = vld [vmem:[#allocation6 + $0x70] sm:$0xff]
        %v838 = vld [vmem:[#allocation6 + $0x78] sm:$0xff]
        %v839 = vld [vmem:[#allocation6 + $0x80] sm:$0xff]
        %v840 = vld [vmem:[#allocation6 + $0x88] sm:$0xff]
        %v841 = vld [vmem:[#allocation6 + $0x90] sm:$0xff]
        %v842 = vld [vmem:[#allocation6 + $0x98] sm:$0xff]
        %v843 = vld [vmem:[#allocation6 + $0xa0] sm:$0xff]
        %v844 = vld [vmem:[#allocation6 + $0xa8] sm:$0xff]
        %v845 = vld [vmem:[#allocation6 + $0xb0] sm:$0xff]
        %v846 = vld [vmem:[#allocation6 + $0xb8] sm:$0xff]
        %v847 = vld [vmem:[#allocation6 + $0xc0] sm:$0xff]
        %v848 = vld [vmem:[#allocation6 + $0xc8] sm:$0xff]
        %v849 = vld [vmem:[#allocation6 + $0xd0] sm:$0xff]
        %v850 = vld [vmem:[#allocation6 + $0xd8] sm:$0xff]
        %v851 = vld [vmem:[#allocation6 + $0xe0] sm:$0xff]
        %v852 = vld [vmem:[#allocation6 + $0xe8] sm:$0xff]
        %v853 = vld [vmem:[#allocation6 + $0xf0] sm:$0xff]
        %v854 = vld [vmem:[#allocation6 + $0xf8] sm:$0xff]
        %v855 = vld [vmem:[%s6] sm:$0x3]
        %v857 = vperm.slane %v855, 0
        %v858 = vperm.slane %v855, 1
        %v893 = vunpack.c.l.b16 %v823
        %v894 = vunpack.c.h.b16 %v823
        %v895 = vunpack.c.l.b16 %v824
        %v896 = vunpack.c.h.b16 %v824
        %v897 = vunpack.c.l.b16 %v825
        %v898 = vunpack.c.h.b16 %v825
        %v899 = vunpack.c.l.b16 %v826
        %v900 = vunpack.c.h.b16 %v826
        %v901 = vunpack.c.l.b16 %v827
        %v902 = vunpack.c.h.b16 %v827
        %v903 = vunpack.c.l.b16 %v828
        %v904 = vunpack.c.h.b16 %v828
        %v905 = vunpack.c.l.b16 %v829
        %v906 = vunpack.c.h.b16 %v829
        %v907 = vunpack.c.l.b16 %v830
        %v908 = vunpack.c.h.b16 %v830
        %v909 = vunpack.c.l.b16 %v831
        %v910 = vunpack.c.h.b16 %v831
        %v911 = vunpack.c.l.b16 %v832
        %v912 = vunpack.c.h.b16 %v832
        %v913 = vunpack.c.l.b16 %v833
        %v914 = vunpack.c.h.b16 %v833
        %v915 = vunpack.c.l.b16 %v834
        %v916 = vunpack.c.h.b16 %v834
        %v917 = vunpack.c.l.b16 %v835
        %v918 = vunpack.c.h.b16 %v835
        %v919 = vunpack.c.l.b16 %v836
        %v920 = vunpack.c.h.b16 %v836
        %v921 = vunpack.c.l.b16 %v837
        %v922 = vunpack.c.h.b16 %v837
        %v923 = vunpack.c.l.b16 %v838
        %v924 = vunpack.c.h.b16 %v838
        %v925 = vunpack.c.l.b16 %v839
        %v926 = vunpack.c.h.b16 %v839
        %v927 = vunpack.c.l.b16 %v840
        %v928 = vunpack.c.h.b16 %v840
        %v929 = vunpack.c.l.b16 %v841
        %v930 = vunpack.c.h.b16 %v841
        %v931 = vunpack.c.l.b16 %v842
        %v932 = vunpack.c.h.b16 %v842
        %v933 = vunpack.c.l.b16 %v843
        %v934 = vunpack.c.h.b16 %v843
        %v935 = vunpack.c.l.b16 %v844
        %v936 = vunpack.c.h.b16 %v844
        %v937 = vunpack.c.l.b16 %v845
        %v938 = vunpack.c.h.b16 %v845
        %v939 = vunpack.c.l.b16 %v846
        %v940 = vunpack.c.h.b16 %v846
        %v941 = vunpack.c.l.b16 %v847
        %v942 = vunpack.c.h.b16 %v847
        %v943 = vunpack.c.l.b16 %v848
        %v944 = vunpack.c.h.b16 %v848
        %v945 = vunpack.c.l.b16 %v849
        %v946 = vunpack.c.h.b16 %v849
        %v947 = vunpack.c.l.b16 %v850
        %v948 = vunpack.c.h.b16 %v850
        %v949 = vunpack.c.l.b16 %v851
        %v950 = vunpack.c.h.b16 %v851
        %v951 = vunpack.c.l.b16 %v852
        %v952 = vunpack.c.h.b16 %v852
        %v953 = vunpack.c.l.b16 %v853
        %v954 = vunpack.c.h.b16 %v853
        %v955 = vunpack.c.l.b16 %v854
        %v956 = vunpack.c.h.b16 %v854
        %v957 = vpack.c.b16 %v895, %v893
        %v958 = vpack.c.b16 %v896, %v894
        %v959 = vpack.c.b16 %v899, %v897
        %v960 = vpack.c.b16 %v900, %v898
        %v961 = vpack.c.b16 %v903, %v901
        %v962 = vpack.c.b16 %v904, %v902
        %v963 = vpack.c.b16 %v907, %v905
        %v964 = vpack.c.b16 %v908, %v906
        %v965 = vpack.c.b16 %v911, %v909
        %v966 = vpack.c.b16 %v912, %v910
        %v967 = vpack.c.b16 %v915, %v913
        %v968 = vpack.c.b16 %v916, %v914
        %v969 = vpack.c.b16 %v919, %v917
        %v970 = vpack.c.b16 %v920, %v918
        %v971 = vpack.c.b16 %v923, %v921
        %v972 = vpack.c.b16 %v924, %v922
        %v973 = vpack.c.b16 %v927, %v925
        %v974 = vpack.c.b16 %v928, %v926
        %v975 = vpack.c.b16 %v931, %v929
        %v976 = vpack.c.b16 %v932, %v930
        %v977 = vpack.c.b16 %v935, %v933
        %v978 = vpack.c.b16 %v936, %v934
        %v979 = vpack.c.b16 %v939, %v937
        %v980 = vpack.c.b16 %v940, %v938
        %v981 = vpack.c.b16 %v943, %v941
        %v982 = vpack.c.b16 %v944, %v942
        %v983 = vpack.c.b16 %v947, %v945
        %v984 = vpack.c.b16 %v948, %v946
        %v985 = vpack.c.b16 %v951, %v949
        %v986 = vpack.c.b16 %v952, %v950
        %v987 = vpack.c.b16 %v955, %v953
        %v988 = vpack.c.b16 %v956, %v954
        %1021 = vmatpush.bf16.msra.mxu0 %v971
        %1022 = vmatpush.bf16.msra.mxu0 %v969
        %1023 = vmatpush.bf16.msra.mxu0 %v967
        %1024 = vmatpush.bf16.msra.mxu0 %v965
        %1025 = vmatpush.bf16.msra.mxu0 %v963
        %1026 = vmatpush.bf16.msra.mxu0 %v961
        %1027 = vmatpush.bf16.msra.mxu0 %v959
        %1028 = vmatpush.bf16.msra.mxu0 %v957
        %1029 = vmatmul.bf16.gmra.mxu0 %v821
        %v1030 = vpop.f32.mrf.mxu0
        %v1031 = vadd.f32 %v857, %v1030
        %v1032 = vpop.f32.mrf.mxu0
        %v1033 = vadd.f32 %v857, %v1032
        %1034 = vdwg.mxu0
        %1035 = vmatpush.bf16.msra.mxu0 %v987
        %1036 = vmatpush.bf16.msra.mxu0 %v985
        %1037 = vmatpush.bf16.msra.mxu0 %v983
        %1038 = vmatpush.bf16.msra.mxu0 %v981
        %1039 = vmatpush.bf16.msra.mxu0 %v979
        %1040 = vmatpush.bf16.msra.mxu0 %v977
        %1041 = vmatpush.bf16.msra.mxu0 %v975
        %1042 = vmatpush.bf16.msra.mxu0 %v973
        %1043 = vmatmul.bf16.gmra.mxu0 %v822
        %v1044 = vpop.f32.mrf.mxu0
        %v1045 = vadd.f32 %v1031, %v1044
        %v1046 = vpop.f32.mrf.mxu0
        %v1047 = vadd.f32 %v1033, %v1046
        %1048 = vdwg.mxu0
        %1049 = vmatpush.bf16.msra.mxu0 %v972
        %1050 = vmatpush.bf16.msra.mxu0 %v970
        %1051 = vmatpush.bf16.msra.mxu0 %v968
        %1052 = vmatpush.bf16.msra.mxu0 %v966
        %1053 = vmatpush.bf16.msra.mxu0 %v964
        %1054 = vmatpush.bf16.msra.mxu0 %v962
        %1055 = vmatpush.bf16.msra.mxu0 %v960
        %1056 = vmatpush.bf16.msra.mxu0 %v958
        %1057 = vmatmul.bf16.gmra.mxu0 %v821
        %v1058 = vpop.f32.mrf.mxu0
        %v1059 = vadd.f32 %v858, %v1058
        %v1060 = vpop.f32.mrf.mxu0
        %v1061 = vadd.f32 %v858, %v1060
        %1062 = vdwg.mxu0
        %1063 = vmatpush.bf16.msra.mxu0 %v988
        %1064 = vmatpush.bf16.msra.mxu0 %v986
        %1065 = vmatpush.bf16.msra.mxu0 %v984
        %1066 = vmatpush.bf16.msra.mxu0 %v982
        %1067 = vmatpush.bf16.msra.mxu0 %v980
        %1068 = vmatpush.bf16.msra.mxu0 %v978
        %1069 = vmatpush.bf16.msra.mxu0 %v976
        %1070 = vmatpush.bf16.msra.mxu0 %v974
        %1071 = vmatmul.bf16.gmra.mxu0 %v822
        %v1072 = vpop.f32.mrf.mxu0
        %v1073 = vadd.f32 %v1059, %v1072
        %v1074 = vpop.f32.mrf.mxu0
        %v1075 = vadd.f32 %v1061, %v1074
        %1076 = vdwg.mxu0
        %v1077 = vadd.f32 %v1045, %v549
        %v1078 = vadd.f32 %v1073, %v550
        %v1079 = vadd.f32 %v1047, %v551
        %v1080 = vadd.f32 %v1075, %v552
        %vm1081 = vcmp.ge.f32.partialorder %v1077, 0.0
        %vm1082 = vcmp.ge.f32.partialorder %v1078, 0.0
        %vm1083 = vcmp.ge.f32.partialorder %v1079, 0.0
        %vm1084 = vcmp.ge.f32.partialorder %v1080, 0.0
        %v1085 = vmul.f32 %v1077, 0.01
        %v1086 = vmul.f32 %v1078, 0.01
        %v1087 = vmul.f32 %v1079, 0.01
        %v1088 = vmul.f32 %v1080, 0.01
        %v1089 = vsel %vm1081, %v1077, %v1085
        %v1090 = vsel %vm1082, %v1078, %v1086
        %v1091 = vsel %vm1083, %v1079, %v1087
        %v1092 = vsel %vm1084, %v1080, %v1088
        %v1093 = vpack.c.bf16 %v1091, %v1089
        %v1094 = vpack.c.bf16 %v1092, %v1090
        %v1095 = vld [vmem:[#allocation7] sm:$0xf]
        %v1096 = vld [vmem:[#allocation7 + $0x4] sm:$0xf]
        %v1097 = vld [vmem:[#allocation7 + $0x8] sm:$0xf]
        %v1098 = vld [vmem:[#allocation7 + $0xc] sm:$0xf]
        %v1099 = vld [vmem:[#allocation7 + $0x10] sm:$0xf]
        %v1100 = vld [vmem:[#allocation7 + $0x14] sm:$0xf]
        %v1101 = vld [vmem:[#allocation7 + $0x18] sm:$0xf]
        %v1102 = vld [vmem:[#allocation7 + $0x1c] sm:$0xf]
        %v1103 = vld [vmem:[#allocation7 + $0x20] sm:$0xf]
        %v1104 = vld [vmem:[#allocation7 + $0x24] sm:$0xf]
        %v1105 = vld [vmem:[#allocation7 + $0x28] sm:$0xf]
        %v1106 = vld [vmem:[#allocation7 + $0x2c] sm:$0xf]
        %v1107 = vld [vmem:[#allocation7 + $0x30] sm:$0xf]
        %v1108 = vld [vmem:[#allocation7 + $0x34] sm:$0xf]
        %v1109 = vld [vmem:[#allocation7 + $0x38] sm:$0xf]
        %v1110 = vld [vmem:[#allocation7 + $0x3c] sm:$0xf]
        %v1111 = vld [vmem:[#allocation7 + $0x40] sm:$0xf]
        %v1112 = vld [vmem:[#allocation7 + $0x44] sm:$0xf]
        %v1113 = vld [vmem:[#allocation7 + $0x48] sm:$0xf]
        %v1114 = vld [vmem:[#allocation7 + $0x4c] sm:$0xf]
        %v1115 = vld [vmem:[#allocation7 + $0x50] sm:$0xf]
        %v1116 = vld [vmem:[#allocation7 + $0x54] sm:$0xf]
        %v1117 = vld [vmem:[#allocation7 + $0x58] sm:$0xf]
        %v1118 = vld [vmem:[#allocation7 + $0x5c] sm:$0xf]
        %v1119 = vld [vmem:[#allocation7 + $0x60] sm:$0xf]
        %v1120 = vld [vmem:[#allocation7 + $0x64] sm:$0xf]
        %v1121 = vld [vmem:[#allocation7 + $0x68] sm:$0xf]
        %v1122 = vld [vmem:[#allocation7 + $0x6c] sm:$0xf]
        %v1123 = vld [vmem:[#allocation7 + $0x70] sm:$0xf]
        %v1124 = vld [vmem:[#allocation7 + $0x74] sm:$0xf]
        %v1125 = vld [vmem:[#allocation7 + $0x78] sm:$0xf]
        %v1126 = vld [vmem:[#allocation7 + $0x7c] sm:$0xf]
        %v1127 = vld [vmem:[%s8] sm:$0x1]
        %v1129 = vperm.slane %v1127, 0
        %v1163 = vunpack.c.l.b16 %v1095
        %v1164 = vunpack.c.l.b16 %v1096
        %v1165 = vunpack.c.l.b16 %v1097
        %v1166 = vunpack.c.l.b16 %v1098
        %v1167 = vunpack.c.l.b16 %v1099
        %v1168 = vunpack.c.l.b16 %v1100
        %v1169 = vunpack.c.l.b16 %v1101
        %v1170 = vunpack.c.l.b16 %v1102
        %v1171 = vunpack.c.l.b16 %v1103
        %v1172 = vunpack.c.l.b16 %v1104
        %v1173 = vunpack.c.l.b16 %v1105
        %v1174 = vunpack.c.l.b16 %v1106
        %v1175 = vunpack.c.l.b16 %v1107
        %v1176 = vunpack.c.l.b16 %v1108
        %v1177 = vunpack.c.l.b16 %v1109
        %v1178 = vunpack.c.l.b16 %v1110
        %v1179 = vunpack.c.l.b16 %v1111
        %v1180 = vunpack.c.l.b16 %v1112
        %v1181 = vunpack.c.l.b16 %v1113
        %v1182 = vunpack.c.l.b16 %v1114
        %v1183 = vunpack.c.l.b16 %v1115
        %v1184 = vunpack.c.l.b16 %v1116
        %v1185 = vunpack.c.l.b16 %v1117
        %v1186 = vunpack.c.l.b16 %v1118
        %v1187 = vunpack.c.l.b16 %v1119
        %v1188 = vunpack.c.l.b16 %v1120
        %v1189 = vunpack.c.l.b16 %v1121
        %v1190 = vunpack.c.l.b16 %v1122
        %v1191 = vunpack.c.l.b16 %v1123
        %v1192 = vunpack.c.l.b16 %v1124
        %v1193 = vunpack.c.l.b16 %v1125
        %v1194 = vunpack.c.l.b16 %v1126
        %v1195 = vpack.c.b16 %v1164, %v1163
        %v1196 = vpack.c.b16 %v1166, %v1165
        %v1197 = vpack.c.b16 %v1168, %v1167
        %v1198 = vpack.c.b16 %v1170, %v1169
        %v1199 = vpack.c.b16 %v1172, %v1171
        %v1200 = vpack.c.b16 %v1174, %v1173
        %v1201 = vpack.c.b16 %v1176, %v1175
        %v1202 = vpack.c.b16 %v1178, %v1177
        %v1203 = vpack.c.b16 %v1180, %v1179
        %v1204 = vpack.c.b16 %v1182, %v1181
        %v1205 = vpack.c.b16 %v1184, %v1183
        %v1206 = vpack.c.b16 %v1186, %v1185
        %v1207 = vpack.c.b16 %v1188, %v1187
        %v1208 = vpack.c.b16 %v1190, %v1189
        %v1209 = vpack.c.b16 %v1192, %v1191
        %v1210 = vpack.c.b16 %v1194, %v1193
        %1227 = vmatpush.bf16.msra.mxu0 %v1202
        %1228 = vmatpush.bf16.msra.mxu0 %v1201
        %1229 = vmatpush.bf16.msra.mxu0 %v1200
        %1230 = vmatpush.bf16.msra.mxu0 %v1199
        %1231 = vmatpush.bf16.msra.mxu0 %v1198
        %1232 = vmatpush.bf16.msra.mxu0 %v1197
        %1233 = vmatpush.bf16.msra.mxu0 %v1196
        %1234 = vmatpush.bf16.msra.mxu0 %v1195
        %1235 = vmatmul.bf16.gmra.mxu0 %v1093
        %v1236 = vpop.f32.mrf.mxu0
        %v1237 = vadd.f32 %v1129, %v1236
        %v1238 = vpop.f32.mrf.mxu0
        %v1239 = vadd.f32 %v1129, %v1238
        %1240 = vdwg.mxu0
        %1241 = vmatpush.bf16.msra.mxu0 %v1210
        %1242 = vmatpush.bf16.msra.mxu0 %v1209
        %1243 = vmatpush.bf16.msra.mxu0 %v1208
        %1244 = vmatpush.bf16.msra.mxu0 %v1207
        %1245 = vmatpush.bf16.msra.mxu0 %v1206
        %1246 = vmatpush.bf16.msra.mxu0 %v1205
        %1247 = vmatpush.bf16.msra.mxu0 %v1204
        %1248 = vmatpush.bf16.msra.mxu0 %v1203
        %1249 = vmatmul.bf16.gmra.mxu0 %v1094
        %v1250 = vpop.f32.mrf.mxu0
        %v1251 = vadd.f32 %v1237, %v1250
        %v1252 = vpop.f32.mrf.mxu0
        %v1253 = vadd.f32 %v1239, %v1252
        %1254 = vdwg.mxu0
        %1255 = vst [vmem:[%s401] sm:$0xff] %v1251
        %1256 = vst [vmem:[%s401 + $0x8] sm:$0xff] %v1253
        %s1257 = smul.u32 2, %s23
        %p1258 = scmp.lt.s32.totalorder %s1257, 3
        %s1259 = scalar_select %p1258, %s1257, 3
        %s1260 = smul.addr %s1259, 8
        %s1261 = scalar_lea.vmem %s9, %s1260
        // Predicated region
        $region73: #{mlp_forward.1} parent=55 // pred_check
          %p1262 = pneg %p235
        $region74: #{mlp_forward.1} parent=55 // pred_check_branch
          %1264 = sbr.rel (%p1262) target = $region76
        $region75: #{mlp_forward.1} parent=55 // pred_region
          %s1265 = smul.u32 2, %s23
        $region76: #{mlp_forward.1} parent=55 // pred_fallthru
          _
      $region56: #{mlp_forward.1} parent=5 // pred_fallthru
        _
      %p1266 = scmp.le.s32.totalorder 2, %s18
      // Predicated region
      $region77: #{mlp_forward.1} parent=5 // pred_check
        %p1267 = pneg %p1266
      $region78: #{mlp_forward.1} parent=5 // pred_check_branch
        %1269 = sbr.rel (%p1267) target = $region80
      $region79: #{mlp_forward.1} parent=5 // pred_region
        %s1270 = ssub.s32 %s18, 2
        // Predicated region
        $region81: #{mlp_forward.1} parent=79 // pred_check
          %p1271 = pneg %p241
        $region82: #{mlp_forward.1} parent=79 // pred_check_branch
          %1273 = sbr.rel (%p1271) target = $region84
        $region83: #{mlp_forward.1} parent=79 // pred_region
          %s1274 = smul.u32 2, %s24
          %p1275 = scmp.lt.s32.totalorder %s1274, 3
          %s1276 = scalar_select %p1275, %s1274, 3
          %s1277 = smul.addr %s1276, 8
          %s1278 = scalar_lea.vmem %s9, %s1277
        $region84: #{mlp_forward.1} parent=79 // pred_fallthru
          _
      $region80: #{mlp_forward.1} parent=5 // pred_fallthru
        _
    $region6: #{mlp_forward.1} parent=1 // loop_footer
      %s22 = sadd.s32 1, %s18
    $region7: #{mlp_forward.1} parent=1 // loop_footer_branch
      %17 = sbr.rel target = $region3
    $region8: #{mlp_forward.1} parent=1 // loop_exit
      _
    %1279 = vsyncpa [#allocation3], 1
    %s1280 = scalar_lea.sflag [#allocation3], 1
    %1281 = vsyncpa %s1280, 1
    %1282 = vsyncpa [#allocation5], 1
    %1283 = vsyncpa [#allocation8], 1

</llo_original>
